<compile_context>
chip_gen: v6e
topology: v6e:2x2x1
jax: 0.10.0
libtpu: 0.0.40
codegen_flags: <defaults>
</compile_context>

<pallas_src>
import jax
import jax.numpy as jnp
from jax import lax
from jax.experimental import pallas as pl
from jax.experimental.pallas import tpu as pltpu


def _pq_kernel(x_ref, cb_ref, o_ref):
    # x_ref:  (tb, M*D)  lane-dense batch tile of the input
    # cb_ref: (M, K, D)  full codebooks, resident in VMEM across the grid
    # o_ref:  (tb, M*D)  lane-dense batch tile of the quantized output
    M, K, D = cb_ref.shape

    # Statically unrolled loop over subvectors; all slices below are static.
    for m in range(M):
        x_m = x_ref[:, m * D:(m + 1) * D]          # (tb, D)
        cb_m = cb_ref[m]                           # (K, D)

        # dot products on the MXU, contracting D directly (no cb transpose):
        # (tb, D) . (K, D) -> (tb, K)
        scores = lax.dot_general(
            x_m, cb_m,
            dimension_numbers=(((1,), (1,)), ((), ())),
            preferred_element_type=jnp.float32)

        # argmax over K with first-occurrence tie-breaking (matches torch).
        max_val = jnp.max(scores, axis=1, keepdims=True)          # (tb, 1)
        k_iota = lax.broadcasted_iota(jnp.int32, scores.shape, 1)  # (tb, K)
        masked = jnp.where(scores == max_val, k_iota, K)
        idx = jnp.min(masked, axis=1, keepdims=True)               # (tb, 1)
        one_hot = (k_iota == idx).astype(cb_m.dtype)               # (tb, K)

        # gather selected codewords: (tb, K) @ (K, D) -> (tb, D)
        sel = lax.dot_general(
            one_hot, cb_m,
            dimension_numbers=(((1,), (0,)), ((), ())),
            preferred_element_type=jnp.float32)

        # static-slice store into the lane-dense output tile
        o_ref[:, m * D:(m + 1) * D] = sel.astype(o_ref.dtype)


def pq_head_forward(x, codebooks, use_pq=True, block_b=512):
    """x: (B, input_dim), codebooks: (M, K, D). Returns (B, input_dim)."""
    if not use_pq:
        return x
    B, input_dim = x.shape
    M, K, D = codebooks.shape
    assert input_dim == M * D

    # Batch tiling: one kernel step per batch tile; codebooks stay resident.
    tb = B if B <= block_b else block_b            # tb == B or tb == 512 (mult of 8)
    n_tiles = pl.cdiv(B, tb)
    Bp = n_tiles * tb
    x_in = x if Bp == B else jnp.pad(x, ((0, Bp - B), (0, 0)))

    out = pl.pallas_call(
        _pq_kernel,
        out_shape=jax.ShapeDtypeStruct((Bp, input_dim), x.dtype),
        grid=(n_tiles,),
        in_specs=[
            pl.BlockSpec((tb, input_dim), lambda i: (i, 0)),   # x batch tile
            pl.BlockSpec((M, K, D), lambda i: (0, 0, 0)),      # codebooks (resident)
        ],
        out_specs=pl.BlockSpec((tb, input_dim), lambda i: (i, 0)),
        compiler_params=pltpu.CompilerParams(
            dimension_semantics=("parallel",)),
    )(x_in, codebooks)

    return out if Bp == B else out[:B]


def _pq_reference(x, codebooks):
    B = x.shape[0]
    M, K, D = codebooks.shape
    sub = x.reshape(B, M, D)
    scores = jnp.einsum("bmd,mkd->bmk", sub, codebooks)
    idx = jnp.argmax(scores, axis=2)                            # (B, M)
    sel = jnp.take_along_axis(
        codebooks[None, :, :, :], idx[:, :, None, None], axis=2
    )[:, :, 0, :]                                               # (B, M, D)
    return sel.reshape(B, M * D)


if __name__ == "__main__":
    # Small, module-consistent shapes.
    batch = 4
    num_subvectors = 8
    code_size = 16
    subvector_dim = 8
    input_dim = num_subvectors * subvector_dim  # 64

    key = jax.random.PRNGKey(0)
    kx, kc = jax.random.split(key)
    x = jax.random.normal(kx, (batch, input_dim), dtype=jnp.float32)
    # nn.init.normal_(codebooks, mean=0.0, std=0.01)
    codebooks = 0.01 * jax.random.normal(
        kc, (num_subvectors, code_size, subvector_dim), dtype=jnp.float32)

    out = pq_head_forward(x, codebooks, use_pq=True)
    out = jax.block_until_ready(out)

    ref = _pq_reference(x, codebooks)
    assert out.shape == (batch, input_dim)
    assert jnp.allclose(out, ref, atol=1e-5, rtol=1e-5), "mismatch vs reference"

    # TODO(synk): training-path soft-assignment STE only changes gradients, not
    # the forward value, so it is intentionally not implemented here.

    print("KERNEL_OK")
</pallas_src>

<mosaic_0001>
module attributes {stable_mosaic.version = 11 : i64} {
  func.func @_pq_kernel(%arg0: i32, %arg1: memref<4x64xf32, #tpu.memory_space<vmem>>, %arg2: memref<8x16x8xf32, #tpu.memory_space<vmem>>, %arg3: memref<4x64xf32, #tpu.memory_space<vmem>>) attributes {dimension_semantics = [#tpu.dimension_semantics<parallel>], iteration_bounds = array<i64: 1>, scalar_prefetch = 0 : i64, scratch_operands = 0 : i64, tpu.core_type = #tpu.core_type<tc>, window_params = [{transform_indices = @transform_0, window_bounds = array<i64: 4, 64>}, {pipeline_mode = #tpu.pipeline_mode<synchronous>, transform_indices = @transform_1, window_bounds = array<i64: 8, 16, 8>}, {transform_indices = @transform_2, window_bounds = array<i64: 4, 64>}]} {
    %c0 = arith.constant 0 : index
    %c0_0 = arith.constant 0 : index
    %0 = vector.load %arg1[%c0, %c0_0] : memref<4x64xf32, #tpu.memory_space<vmem>>, vector<4x8xf32>
    %c0_1 = arith.constant 0 : index
    %c0_2 = arith.constant 0 : index
    %c0_3 = arith.constant 0 : index
    %1 = vector.load %arg2[%c0_1, %c0_2, %c0_3] : memref<8x16x8xf32, #tpu.memory_space<vmem>>, vector<1x16x8xf32>
    %2 = vector.shape_cast %1 : vector<1x16x8xf32> to vector<16x8xf32>
    %cst = arith.constant dense<0.000000e+00> : vector<4x16xf32>
    %3 = tpu.matmul %0, %2, %cst {dimension_numbers = #tpu.dot_dimension_numbers<[1], [1], [0], [0], [0, 0, 1, 0], [], []>} : vector<4x8xf32>, vector<16x8xf32>, vector<4x16xf32> -> vector<4x16xf32>
    %cst_4 = arith.constant dense<0xFF800000> : vector<4xf32>
    %4 = vector.multi_reduction <maximumf>, %3, %cst_4 [1] : vector<4x16xf32> to vector<4xf32>
    %5 = vector.shape_cast %4 : vector<4xf32> to vector<4x1xf32>
    %6 = tpu.iota {dimensions = array<i32: 1>} : vector<4x16xi32>
    %7 = vector.broadcast %5 : vector<4x1xf32> to vector<4x16xf32>
    %8 = arith.cmpf oeq, %3, %7 : vector<4x16xf32>
    %c16_i32 = arith.constant 16 : i32
    %9 = vector.broadcast %c16_i32 : i32 to vector<4x16xi32>
    %10 = arith.select %8, %6, %9 : vector<4x16xi1>, vector<4x16xi32>
    %cst_5 = arith.constant dense<2147483647> : vector<4xi32>
    %11 = vector.multi_reduction <minsi>, %10, %cst_5 [1] : vector<4x16xi32> to vector<4xi32>
    %12 = vector.shape_cast %11 : vector<4xi32> to vector<4x1xi32>
    %13 = vector.broadcast %12 : vector<4x1xi32> to vector<4x16xi32>
    %14 = arith.cmpi eq, %6, %13 : vector<4x16xi32>
    %15 = arith.extui %14 : vector<4x16xi1> to vector<4x16xi32>
    %16 = arith.sitofp %15 : vector<4x16xi32> to vector<4x16xf32>
    %cst_6 = arith.constant dense<0.000000e+00> : vector<4x8xf32>
    %17 = tpu.matmul %16, %2, %cst_6 {dimension_numbers = #tpu.dot_dimension_numbers<[1], [0], [0], [1], [0, 0, 1, 1], [], []>} : vector<4x16xf32>, vector<16x8xf32>, vector<4x8xf32> -> vector<4x8xf32>
    %c0_7 = arith.constant 0 : index
    %c0_8 = arith.constant 0 : index
    %18 = vector.load %arg3[%c0_7, %c0_8] : memref<4x64xf32, #tpu.memory_space<vmem>>, vector<4x8xf32>
    tpu.vector_store %arg3[%c0_7, %c0_8], %17 {strides = array<i32>} : memref<4x64xf32, #tpu.memory_space<vmem>>, vector<4x8xf32>,
    %c0_9 = arith.constant 0 : index
    %c8 = arith.constant 8 : index
    %19 = vector.load %arg1[%c0_9, %c8] : memref<4x64xf32, #tpu.memory_space<vmem>>, vector<4x8xf32>
    %c1 = arith.constant 1 : index
    %c0_10 = arith.constant 0 : index
    %c0_11 = arith.constant 0 : index
    %20 = vector.load %arg2[%c1, %c0_10, %c0_11] : memref<8x16x8xf32, #tpu.memory_space<vmem>>, vector<1x16x8xf32>
    %21 = vector.shape_cast %20 : vector<1x16x8xf32> to vector<16x8xf32>
    %cst_12 = arith.constant dense<0.000000e+00> : vector<4x16xf32>
    %22 = tpu.matmul %19, %21, %cst_12 {dimension_numbers = #tpu.dot_dimension_numbers<[1], [1], [0], [0], [0, 0, 1, 0], [], []>} : vector<4x8xf32>, vector<16x8xf32>, vector<4x16xf32> -> vector<4x16xf32>
    %cst_13 = arith.constant dense<0xFF800000> : vector<4xf32>
    %23 = vector.multi_reduction <maximumf>, %22, %cst_13 [1] : vector<4x16xf32> to vector<4xf32>
    %24 = vector.shape_cast %23 : vector<4xf32> to vector<4x1xf32>
    %25 = tpu.iota {dimensions = array<i32: 1>} : vector<4x16xi32>
    %26 = vector.broadcast %24 : vector<4x1xf32> to vector<4x16xf32>
    %27 = arith.cmpf oeq, %22, %26 : vector<4x16xf32>
    %c16_i32_14 = arith.constant 16 : i32
    %28 = vector.broadcast %c16_i32_14 : i32 to vector<4x16xi32>
    %29 = arith.select %27, %25, %28 : vector<4x16xi1>, vector<4x16xi32>
    %cst_15 = arith.constant dense<2147483647> : vector<4xi32>
    %30 = vector.multi_reduction <minsi>, %29, %cst_15 [1] : vector<4x16xi32> to vector<4xi32>
    %31 = vector.shape_cast %30 : vector<4xi32> to vector<4x1xi32>
    %32 = vector.broadcast %31 : vector<4x1xi32> to vector<4x16xi32>
    %33 = arith.cmpi eq, %25, %32 : vector<4x16xi32>
    %34 = arith.extui %33 : vector<4x16xi1> to vector<4x16xi32>
    %35 = arith.sitofp %34 : vector<4x16xi32> to vector<4x16xf32>
    %cst_16 = arith.constant dense<0.000000e+00> : vector<4x8xf32>
    %36 = tpu.matmul %35, %21, %cst_16 {dimension_numbers = #tpu.dot_dimension_numbers<[1], [0], [0], [1], [0, 0, 1, 1], [], []>} : vector<4x16xf32>, vector<16x8xf32>, vector<4x8xf32> -> vector<4x8xf32>
    %c0_17 = arith.constant 0 : index
    %c8_18 = arith.constant 8 : index
    %37 = vector.load %arg3[%c0_17, %c8_18] : memref<4x64xf32, #tpu.memory_space<vmem>>, vector<4x8xf32>
    tpu.vector_store %arg3[%c0_17, %c8_18], %36 {strides = array<i32>} : memref<4x64xf32, #tpu.memory_space<vmem>>, vector<4x8xf32>,
    %c0_19 = arith.constant 0 : index
    %c16 = arith.constant 16 : index
    %38 = vector.load %arg1[%c0_19, %c16] : memref<4x64xf32, #tpu.memory_space<vmem>>, vector<4x8xf32>
    %c2 = arith.constant 2 : index
    %c0_20 = arith.constant 0 : index
    %c0_21 = arith.constant 0 : index
    %39 = vector.load %arg2[%c2, %c0_20, %c0_21] : memref<8x16x8xf32, #tpu.memory_space<vmem>>, vector<1x16x8xf32>
    %40 = vector.shape_cast %39 : vector<1x16x8xf32> to vector<16x8xf32>
    %cst_22 = arith.constant dense<0.000000e+00> : vector<4x16xf32>
    %41 = tpu.matmul %38, %40, %cst_22 {dimension_numbers = #tpu.dot_dimension_numbers<[1], [1], [0], [0], [0, 0, 1, 0], [], []>} : vector<4x8xf32>, vector<16x8xf32>, vector<4x16xf32> -> vector<4x16xf32>
    %cst_23 = arith.constant dense<0xFF800000> : vector<4xf32>
    %42 = vector.multi_reduction <maximumf>, %41, %cst_23 [1] : vector<4x16xf32> to vector<4xf32>
    %43 = vector.shape_cast %42 : vector<4xf32> to vector<4x1xf32>
    %44 = tpu.iota {dimensions = array<i32: 1>} : vector<4x16xi32>
    %45 = vector.broadcast %43 : vector<4x1xf32> to vector<4x16xf32>
    %46 = arith.cmpf oeq, %41, %45 : vector<4x16xf32>
    %c16_i32_24 = arith.constant 16 : i32
    %47 = vector.broadcast %c16_i32_24 : i32 to vector<4x16xi32>
    %48 = arith.select %46, %44, %47 : vector<4x16xi1>, vector<4x16xi32>
    %cst_25 = arith.constant dense<2147483647> : vector<4xi32>
    %49 = vector.multi_reduction <minsi>, %48, %cst_25 [1] : vector<4x16xi32> to vector<4xi32>
    %50 = vector.shape_cast %49 : vector<4xi32> to vector<4x1xi32>
    %51 = vector.broadcast %50 : vector<4x1xi32> to vector<4x16xi32>
    %52 = arith.cmpi eq, %44, %51 : vector<4x16xi32>
    %53 = arith.extui %52 : vector<4x16xi1> to vector<4x16xi32>
    %54 = arith.sitofp %53 : vector<4x16xi32> to vector<4x16xf32>
    %cst_26 = arith.constant dense<0.000000e+00> : vector<4x8xf32>
    %55 = tpu.matmul %54, %40, %cst_26 {dimension_numbers = #tpu.dot_dimension_numbers<[1], [0], [0], [1], [0, 0, 1, 1], [], []>} : vector<4x16xf32>, vector<16x8xf32>, vector<4x8xf32> -> vector<4x8xf32>
    %c0_27 = arith.constant 0 : index
    %c16_28 = arith.constant 16 : index
    %56 = vector.load %arg3[%c0_27, %c16_28] : memref<4x64xf32, #tpu.memory_space<vmem>>, vector<4x8xf32>
    tpu.vector_store %arg3[%c0_27, %c16_28], %55 {strides = array<i32>} : memref<4x64xf32, #tpu.memory_space<vmem>>, vector<4x8xf32>,
    %c0_29 = arith.constant 0 : index
    %c24 = arith.constant 24 : index
    %57 = vector.load %arg1[%c0_29, %c24] : memref<4x64xf32, #tpu.memory_space<vmem>>, vector<4x8xf32>
    %c3 = arith.constant 3 : index
    %c0_30 = arith.constant 0 : index
    %c0_31 = arith.constant 0 : index
    %58 = vector.load %arg2[%c3, %c0_30, %c0_31] : memref<8x16x8xf32, #tpu.memory_space<vmem>>, vector<1x16x8xf32>
    %59 = vector.shape_cast %58 : vector<1x16x8xf32> to vector<16x8xf32>
    %cst_32 = arith.constant dense<0.000000e+00> : vector<4x16xf32>
    %60 = tpu.matmul %57, %59, %cst_32 {dimension_numbers = #tpu.dot_dimension_numbers<[1], [1], [0], [0], [0, 0, 1, 0], [], []>} : vector<4x8xf32>, vector<16x8xf32>, vector<4x16xf32> -> vector<4x16xf32>
    %cst_33 = arith.constant dense<0xFF800000> : vector<4xf32>
    %61 = vector.multi_reduction <maximumf>, %60, %cst_33 [1] : vector<4x16xf32> to vector<4xf32>
    %62 = vector.shape_cast %61 : vector<4xf32> to vector<4x1xf32>
    %63 = tpu.iota {dimensions = array<i32: 1>} : vector<4x16xi32>
    %64 = vector.broadcast %62 : vector<4x1xf32> to vector<4x16xf32>
    %65 = arith.cmpf oeq, %60, %64 : vector<4x16xf32>
    %c16_i32_34 = arith.constant 16 : i32
    %66 = vector.broadcast %c16_i32_34 : i32 to vector<4x16xi32>
    %67 = arith.select %65, %63, %66 : vector<4x16xi1>, vector<4x16xi32>
    %cst_35 = arith.constant dense<2147483647> : vector<4xi32>
    %68 = vector.multi_reduction <minsi>, %67, %cst_35 [1] : vector<4x16xi32> to vector<4xi32>
    %69 = vector.shape_cast %68 : vector<4xi32> to vector<4x1xi32>
    %70 = vector.broadcast %69 : vector<4x1xi32> to vector<4x16xi32>
    %71 = arith.cmpi eq, %63, %70 : vector<4x16xi32>
    %72 = arith.extui %71 : vector<4x16xi1> to vector<4x16xi32>
    %73 = arith.sitofp %72 : vector<4x16xi32> to vector<4x16xf32>
    %cst_36 = arith.constant dense<0.000000e+00> : vector<4x8xf32>
    %74 = tpu.matmul %73, %59, %cst_36 {dimension_numbers = #tpu.dot_dimension_numbers<[1], [0], [0], [1], [0, 0, 1, 1], [], []>} : vector<4x16xf32>, vector<16x8xf32>, vector<4x8xf32> -> vector<4x8xf32>
    %c0_37 = arith.constant 0 : index
    %c24_38 = arith.constant 24 : index
    %75 = vector.load %arg3[%c0_37, %c24_38] : memref<4x64xf32, #tpu.memory_space<vmem>>, vector<4x8xf32>
    tpu.vector_store %arg3[%c0_37, %c24_38], %74 {strides = array<i32>} : memref<4x64xf32, #tpu.memory_space<vmem>>, vector<4x8xf32>,
    %c0_39 = arith.constant 0 : index
    %c32 = arith.constant 32 : index
    %76 = vector.load %arg1[%c0_39, %c32] : memref<4x64xf32, #tpu.memory_space<vmem>>, vector<4x8xf32>
    %c4 = arith.constant 4 : index
    %c0_40 = arith.constant 0 : index
    %c0_41 = arith.constant 0 : index
    %77 = vector.load %arg2[%c4, %c0_40, %c0_41] : memref<8x16x8xf32, #tpu.memory_space<vmem>>, vector<1x16x8xf32>
    %78 = vector.shape_cast %77 : vector<1x16x8xf32> to vector<16x8xf32>
    %cst_42 = arith.constant dense<0.000000e+00> : vector<4x16xf32>
    %79 = tpu.matmul %76, %78, %cst_42 {dimension_numbers = #tpu.dot_dimension_numbers<[1], [1], [0], [0], [0, 0, 1, 0], [], []>} : vector<4x8xf32>, vector<16x8xf32>, vector<4x16xf32> -> vector<4x16xf32>
    %cst_43 = arith.constant dense<0xFF800000> : vector<4xf32>
    %80 = vector.multi_reduction <maximumf>, %79, %cst_43 [1] : vector<4x16xf32> to vector<4xf32>
    %81 = vector.shape_cast %80 : vector<4xf32> to vector<4x1xf32>
    %82 = tpu.iota {dimensions = array<i32: 1>} : vector<4x16xi32>
    %83 = vector.broadcast %81 : vector<4x1xf32> to vector<4x16xf32>
    %84 = arith.cmpf oeq, %79, %83 : vector<4x16xf32>
    %c16_i32_44 = arith.constant 16 : i32
    %85 = vector.broadcast %c16_i32_44 : i32 to vector<4x16xi32>
    %86 = arith.select %84, %82, %85 : vector<4x16xi1>, vector<4x16xi32>
    %cst_45 = arith.constant dense<2147483647> : vector<4xi32>
    %87 = vector.multi_reduction <minsi>, %86, %cst_45 [1] : vector<4x16xi32> to vector<4xi32>
    %88 = vector.shape_cast %87 : vector<4xi32> to vector<4x1xi32>
    %89 = vector.broadcast %88 : vector<4x1xi32> to vector<4x16xi32>
    %90 = arith.cmpi eq, %82, %89 : vector<4x16xi32>
    %91 = arith.extui %90 : vector<4x16xi1> to vector<4x16xi32>
    %92 = arith.sitofp %91 : vector<4x16xi32> to vector<4x16xf32>
    %cst_46 = arith.constant dense<0.000000e+00> : vector<4x8xf32>
    %93 = tpu.matmul %92, %78, %cst_46 {dimension_numbers = #tpu.dot_dimension_numbers<[1], [0], [0], [1], [0, 0, 1, 1], [], []>} : vector<4x16xf32>, vector<16x8xf32>, vector<4x8xf32> -> vector<4x8xf32>
    %c0_47 = arith.constant 0 : index
    %c32_48 = arith.constant 32 : index
    %94 = vector.load %arg3[%c0_47, %c32_48] : memref<4x64xf32, #tpu.memory_space<vmem>>, vector<4x8xf32>
    tpu.vector_store %arg3[%c0_47, %c32_48], %93 {strides = array<i32>} : memref<4x64xf32, #tpu.memory_space<vmem>>, vector<4x8xf32>,
    %c0_49 = arith.constant 0 : index
    %c40 = arith.constant 40 : index
    %95 = vector.load %arg1[%c0_49, %c40] : memref<4x64xf32, #tpu.memory_space<vmem>>, vector<4x8xf32>
    %c5 = arith.constant 5 : index
    %c0_50 = arith.constant 0 : index
    %c0_51 = arith.constant 0 : index
    %96 = vector.load %arg2[%c5, %c0_50, %c0_51] : memref<8x16x8xf32, #tpu.memory_space<vmem>>, vector<1x16x8xf32>
    %97 = vector.shape_cast %96 : vector<1x16x8xf32> to vector<16x8xf32>
    %cst_52 = arith.constant dense<0.000000e+00> : vector<4x16xf32>
    %98 = tpu.matmul %95, %97, %cst_52 {dimension_numbers = #tpu.dot_dimension_numbers<[1], [1], [0], [0], [0, 0, 1, 0], [], []>} : vector<4x8xf32>, vector<16x8xf32>, vector<4x16xf32> -> vector<4x16xf32>
    %cst_53 = arith.constant dense<0xFF800000> : vector<4xf32>
    %99 = vector.multi_reduction <maximumf>, %98, %cst_53 [1] : vector<4x16xf32> to vector<4xf32>
    %100 = vector.shape_cast %99 : vector<4xf32> to vector<4x1xf32>
    %101 = tpu.iota {dimensions = array<i32: 1>} : vector<4x16xi32>
    %102 = vector.broadcast %100 : vector<4x1xf32> to vector<4x16xf32>
    %103 = arith.cmpf oeq, %98, %102 : vector<4x16xf32>
    %c16_i32_54 = arith.constant 16 : i32
    %104 = vector.broadcast %c16_i32_54 : i32 to vector<4x16xi32>
    %105 = arith.select %103, %101, %104 : vector<4x16xi1>, vector<4x16xi32>
    %cst_55 = arith.constant dense<2147483647> : vector<4xi32>
    %106 = vector.multi_reduction <minsi>, %105, %cst_55 [1] : vector<4x16xi32> to vector<4xi32>
    %107 = vector.shape_cast %106 : vector<4xi32> to vector<4x1xi32>
    %108 = vector.broadcast %107 : vector<4x1xi32> to vector<4x16xi32>
    %109 = arith.cmpi eq, %101, %108 : vector<4x16xi32>
    %110 = arith.extui %109 : vector<4x16xi1> to vector<4x16xi32>
    %111 = arith.sitofp %110 : vector<4x16xi32> to vector<4x16xf32>
    %cst_56 = arith.constant dense<0.000000e+00> : vector<4x8xf32>
    %112 = tpu.matmul %111, %97, %cst_56 {dimension_numbers = #tpu.dot_dimension_numbers<[1], [0], [0], [1], [0, 0, 1, 1], [], []>} : vector<4x16xf32>, vector<16x8xf32>, vector<4x8xf32> -> vector<4x8xf32>
    %c0_57 = arith.constant 0 : index
    %c40_58 = arith.constant 40 : index
    %113 = vector.load %arg3[%c0_57, %c40_58] : memref<4x64xf32, #tpu.memory_space<vmem>>, vector<4x8xf32>
    tpu.vector_store %arg3[%c0_57, %c40_58], %112 {strides = array<i32>} : memref<4x64xf32, #tpu.memory_space<vmem>>, vector<4x8xf32>,
    %c0_59 = arith.constant 0 : index
    %c48 = arith.constant 48 : index
    %114 = vector.load %arg1[%c0_59, %c48] : memref<4x64xf32, #tpu.memory_space<vmem>>, vector<4x8xf32>
    %c6 = arith.constant 6 : index
    %c0_60 = arith.constant 0 : index
    %c0_61 = arith.constant 0 : index
    %115 = vector.load %arg2[%c6, %c0_60, %c0_61] : memref<8x16x8xf32, #tpu.memory_space<vmem>>, vector<1x16x8xf32>
    %116 = vector.shape_cast %115 : vector<1x16x8xf32> to vector<16x8xf32>
    %cst_62 = arith.constant dense<0.000000e+00> : vector<4x16xf32>
    %117 = tpu.matmul %114, %116, %cst_62 {dimension_numbers = #tpu.dot_dimension_numbers<[1], [1], [0], [0], [0, 0, 1, 0], [], []>} : vector<4x8xf32>, vector<16x8xf32>, vector<4x16xf32> -> vector<4x16xf32>
    %cst_63 = arith.constant dense<0xFF800000> : vector<4xf32>
    %118 = vector.multi_reduction <maximumf>, %117, %cst_63 [1] : vector<4x16xf32> to vector<4xf32>
    %119 = vector.shape_cast %118 : vector<4xf32> to vector<4x1xf32>
    %120 = tpu.iota {dimensions = array<i32: 1>} : vector<4x16xi32>
    %121 = vector.broadcast %119 : vector<4x1xf32> to vector<4x16xf32>
    %122 = arith.cmpf oeq, %117, %121 : vector<4x16xf32>
    %c16_i32_64 = arith.constant 16 : i32
    %123 = vector.broadcast %c16_i32_64 : i32 to vector<4x16xi32>
    %124 = arith.select %122, %120, %123 : vector<4x16xi1>, vector<4x16xi32>
    %cst_65 = arith.constant dense<2147483647> : vector<4xi32>
    %125 = vector.multi_reduction <minsi>, %124, %cst_65 [1] : vector<4x16xi32> to vector<4xi32>
    %126 = vector.shape_cast %125 : vector<4xi32> to vector<4x1xi32>
    %127 = vector.broadcast %126 : vector<4x1xi32> to vector<4x16xi32>
    %128 = arith.cmpi eq, %120, %127 : vector<4x16xi32>
    %129 = arith.extui %128 : vector<4x16xi1> to vector<4x16xi32>
    %130 = arith.sitofp %129 : vector<4x16xi32> to vector<4x16xf32>
    %cst_66 = arith.constant dense<0.000000e+00> : vector<4x8xf32>
    %131 = tpu.matmul %130, %116, %cst_66 {dimension_numbers = #tpu.dot_dimension_numbers<[1], [0], [0], [1], [0, 0, 1, 1], [], []>} : vector<4x16xf32>, vector<16x8xf32>, vector<4x8xf32> -> vector<4x8xf32>
    %c0_67 = arith.constant 0 : index
    %c48_68 = arith.constant 48 : index
    %132 = vector.load %arg3[%c0_67, %c48_68] : memref<4x64xf32, #tpu.memory_space<vmem>>, vector<4x8xf32>
    tpu.vector_store %arg3[%c0_67, %c48_68], %131 {strides = array<i32>} : memref<4x64xf32, #tpu.memory_space<vmem>>, vector<4x8xf32>,
    %c0_69 = arith.constant 0 : index
    %c56 = arith.constant 56 : index
    %133 = vector.load %arg1[%c0_69, %c56] : memref<4x64xf32, #tpu.memory_space<vmem>>, vector<4x8xf32>
    %c7 = arith.constant 7 : index
    %c0_70 = arith.constant 0 : index
    %c0_71 = arith.constant 0 : index
    %134 = vector.load %arg2[%c7, %c0_70, %c0_71] : memref<8x16x8xf32, #tpu.memory_space<vmem>>, vector<1x16x8xf32>
    %135 = vector.shape_cast %134 : vector<1x16x8xf32> to vector<16x8xf32>
    %cst_72 = arith.constant dense<0.000000e+00> : vector<4x16xf32>
    %136 = tpu.matmul %133, %135, %cst_72 {dimension_numbers = #tpu.dot_dimension_numbers<[1], [1], [0], [0], [0, 0, 1, 0], [], []>} : vector<4x8xf32>, vector<16x8xf32>, vector<4x16xf32> -> vector<4x16xf32>
    %cst_73 = arith.constant dense<0xFF800000> : vector<4xf32>
    %137 = vector.multi_reduction <maximumf>, %136, %cst_73 [1] : vector<4x16xf32> to vector<4xf32>
    %138 = vector.shape_cast %137 : vector<4xf32> to vector<4x1xf32>
    %139 = tpu.iota {dimensions = array<i32: 1>} : vector<4x16xi32>
    %140 = vector.broadcast %138 : vector<4x1xf32> to vector<4x16xf32>
    %141 = arith.cmpf oeq, %136, %140 : vector<4x16xf32>
    %c16_i32_74 = arith.constant 16 : i32
    %142 = vector.broadcast %c16_i32_74 : i32 to vector<4x16xi32>
    %143 = arith.select %141, %139, %142 : vector<4x16xi1>, vector<4x16xi32>
    %cst_75 = arith.constant dense<2147483647> : vector<4xi32>
    %144 = vector.multi_reduction <minsi>, %143, %cst_75 [1] : vector<4x16xi32> to vector<4xi32>
    %145 = vector.shape_cast %144 : vector<4xi32> to vector<4x1xi32>
    %146 = vector.broadcast %145 : vector<4x1xi32> to vector<4x16xi32>
    %147 = arith.cmpi eq, %139, %146 : vector<4x16xi32>
    %148 = arith.extui %147 : vector<4x16xi1> to vector<4x16xi32>
    %149 = arith.sitofp %148 : vector<4x16xi32> to vector<4x16xf32>
    %cst_76 = arith.constant dense<0.000000e+00> : vector<4x8xf32>
    %150 = tpu.matmul %149, %135, %cst_76 {dimension_numbers = #tpu.dot_dimension_numbers<[1], [0], [0], [1], [0, 0, 1, 1], [], []>} : vector<4x16xf32>, vector<16x8xf32>, vector<4x8xf32> -> vector<4x8xf32>
    %c0_77 = arith.constant 0 : index
    %c56_78 = arith.constant 56 : index
    %151 = vector.load %arg3[%c0_77, %c56_78] : memref<4x64xf32, #tpu.memory_space<vmem>>, vector<4x8xf32>
    tpu.vector_store %arg3[%c0_77, %c56_78], %150 {strides = array<i32>} : memref<4x64xf32, #tpu.memory_space<vmem>>, vector<4x8xf32>,
    return
  }
  func.func @transform_0(%arg0: i32) -> (i32, i32) {
    %c0_i32 = arith.constant 0 : i32
    %c0_i32_0 = arith.constant 0 : i32
    return %arg0, %c0_i32 : i32, i32
  }
  func.func @transform_1(%arg0: i32) -> (i32, i32, i32) {
    %c0_i32 = arith.constant 0 : i32
    %c0_i32_0 = arith.constant 0 : i32
    %c0_i32_1 = arith.constant 0 : i32
    %c0_i32_2 = arith.constant 0 : i32
    return %c0_i32, %c0_i32_0, %c0_i32_1 : i32, i32, i32
  }
  func.func @transform_2(%arg0: i32) -> (i32, i32) {
    %c0_i32 = arith.constant 0 : i32
    %c0_i32_0 = arith.constant 0 : i32
    return %arg0, %c0_i32 : i32, i32
  }
}

</mosaic_0001>

<llo_original>
// kernel: tpu_custom_call.1
$region0: #{tpu_custom_call.1}
  #allocation0 [shape = 'u32[]', space=smem, size = 0x4, offset = 0x4, fixed_abs, tag = 'smem constant byte address 0x4 - core index']
  #allocation1 [shape = 'u32[144,128]{1,0:T(1,128)}', space=vmem, size = 0x12000, scoped, tag = 'internal scratch']
  %s0 = inlined_call_operand.vmem [shape: f32[4,64], index: 0, kind: input, shape index: {}]
  %s1 = inlined_call_operand.vmem [shape: f32[8,16,8], index: 1, kind: input, shape index: {}]
  %s2 = inlined_call_operand.hbm [shape: f32[4,64], index: 2, kind: output, shape index: {}]
  %s3 = sld [smem:[#allocation0]]
  $region18: #{tpu_custom_call.1} parent=0
    _
  %s5 = ssub.s32 1, %s3
  %s6 = scalar_select 0, %s5, %s3
  $region1: #{tpu_custom_call.1} parent=0
    #allocation2 [shape = 'u8[2048]{0}', space=vmem, size = 0x800, scoped, tag = 'output window, operand 0, single buffered']
    #allocation3 [shape = 's32[1]{0}', space=sflag, size = 0x4, scoped, tag = 'scoped memory for tpu_custom_call.1']
    %7 = vsyncpa [#allocation3], 0
    // Predicated region
    $region2: #{tpu_custom_call.1} parent=1 // pred_check
      _
    $region3: #{tpu_custom_call.1} parent=1 // pred_check_branch
      %9 = sbr.rel (0) target = $region5
    $region4: #{tpu_custom_call.1} parent=1 // pred_region
      _
    $region5: #{tpu_custom_call.1} parent=1 // pred_fallthru
      _
    // Predicated region
    $region6: #{tpu_custom_call.1} parent=1 // pred_check
      _
    $region7: #{tpu_custom_call.1} parent=1 // pred_check_branch
      %11 = sbr.rel (0) target = $region9
    $region8: #{tpu_custom_call.1} parent=1 // pred_region
      _
    $region9: #{tpu_custom_call.1} parent=1 // pred_fallthru
      _
    %v12 = vld [vmem:[%s0] sm:$0xf]
    %v13 = vld [vmem:[%s1] sm:$0xff]
    %v14 = vld [vmem:[%s1 + $0x8] sm:$0xff]
    %vm15 = vcmask 64512
    %v17 = vsel %vm15, %v12, 0
    %v20 = vsel %vm15, %v13, 0
    %v23 = vsel %vm15, %v14, 0
    %25 = vmatprep.subr.mxu0 0.0
    %26 = vmatpush1.xpose.msra.mxu0 0.0
    %27 = vmatprep.subr.mxu0 0.0
    %28 = vmatpush1.xpose.msra.mxu0 0.0
    %29 = vmatprep.subr.mxu0 0.0
    %30 = vmatpush1.xpose.msra.mxu0 0.0
    %31 = vmatprep.subr.mxu0 0.0
    %32 = vmatpush1.xpose.msra.mxu0 0.0
    %33 = vmatprep.subr.mxu0 0.0
    %34 = vmatpush1.xpose.msra.mxu0 0.0
    %35 = vmatprep.subr.mxu0 0.0
    %36 = vmatpush1.xpose.msra.mxu0 0.0
    %37 = vmatprep.subr.mxu0 0.0
    %38 = vmatpush1.xpose.msra.mxu0 0.0
    %39 = vmatprep.subr.mxu0 0.0
    %40 = vmatpush1.xpose.msra.mxu0 0.0
    %41 = vmatprep.subr.mxu0 0.0
    %42 = vmatpush1.xpose.msra.mxu0 0.0
    %43 = vmatprep.subr.mxu0 0.0
    %44 = vmatpush1.xpose.msra.mxu0 0.0
    %45 = vmatprep.subr.mxu0 0.0
    %46 = vmatpush1.xpose.msra.mxu0 0.0
    %47 = vmatprep.subr.mxu0 0.0
    %48 = vmatpush1.xpose.msra.mxu0 0.0
    %49 = vmatprep.subr.mxu0 0.0
    %50 = vmatpush1.xpose.msra.mxu0 0.0
    %51 = vmatprep.subr.mxu0 0.0
    %52 = vmatpush1.xpose.msra.mxu0 0.0
    %53 = vmatprep.subr.mxu0 0.0
    %54 = vmatpush1.xpose.msra.mxu0 %v23
    %55 = vmatprep.subr.mxu0 0.0
    %56 = vmatpush1.xpose.msra.mxu0 %v20
    %57 = vmatprep.subr.mxu0 0.0
    %58 = vmatpush2.xpose.msra.mxu0 0.0
    %59 = vmatprep.subr.mxu0 0.0
    %60 = vmatpush2.xpose.msra.mxu0 0.0
    %61 = vmatprep.subr.mxu0 0.0
    %62 = vmatpush2.xpose.msra.mxu0 0.0
    %63 = vmatprep.subr.mxu0 0.0
    %64 = vmatpush2.xpose.msra.mxu0 0.0
    %65 = vmatprep.subr.mxu0 0.0
    %66 = vmatpush2.xpose.msra.mxu0 0.0
    %67 = vmatprep.subr.mxu0 0.0
    %68 = vmatpush2.xpose.msra.mxu0 0.0
    %69 = vmatprep.subr.mxu0 0.0
    %70 = vmatpush2.xpose.msra.mxu0 0.0
    %71 = vmatprep.subr.mxu0 0.0
    %72 = vmatpush2.xpose.msra.mxu0 0.0
    %73 = vmatprep.subr.mxu0 0.0
    %74 = vmatpush2.xpose.msra.mxu0 0.0
    %75 = vmatprep.subr.mxu0 0.0
    %76 = vmatpush2.xpose.msra.mxu0 0.0
    %77 = vmatprep.subr.mxu0 0.0
    %78 = vmatpush2.xpose.msra.mxu0 0.0
    %79 = vmatprep.subr.mxu0 0.0
    %80 = vmatpush2.xpose.msra.mxu0 0.0
    %81 = vmatprep.subr.mxu0 0.0
    %82 = vmatpush2.xpose.msra.mxu0 0.0
    %83 = vmatprep.subr.mxu0 0.0
    %84 = vmatpush2.xpose.msra.mxu0 0.0
    %85 = vmatprep.subr.mxu0 0.0
    %86 = vmatpush2.xpose.msra.mxu0 0.0
    %87 = vmatprep.subr.mxu0 0.0
    %88 = vmatpush2.xpose.msra.mxu0 0.0
    %89 = vmatprep.mubr.f32.mxu0 0.0
    %90 = vmatmul.mubr.f32.gmra.mxu0 %v17
    %v91 = vpop.f32.mrf.mxu0
    %v92 = vadd.f32 0.0, %v91
    %v93 = vpop.f32.mrf.mxu0
    %94 = vdwg.mxu0
    %vm95 = vcmask 125952
    %v96 = vsel %vm95, %v92, -inf
    %97 = vmax.xlane.f32.xlu0 %v96
    %v98 = vpop.xlane.xlu0 %97
    %v99 = vlaneseq
    %v100 = vand.u32 %v99, 127
    %vm101 = vcmp.eq.f32.partialorder %v92, %v98
    %v102 = vsel %vm101, %v100, 16
    %v103 = vsel %vm95, %v102, 2147483647
    %v104 = vand.u32 %v103, 65535
    %v105 = vshra.s32 %v103, 16
    %v106 = vcvt.s32.f32 %v104
    %v107 = vcvt.s32.f32 %v105
    %108 = vmin.xlane.f32.xlu0 %v107
    %v109 = vpop.xlane.xlu0 %108
    %vm110 = vcmp.eq.f32.partialorder %v107, %v109
    %v111 = vsel %vm110, %v106, inf
    %112 = vmin.xlane.f32.xlu0 %v111
    %v113 = vpop.xlane.xlu0 %112
    %v114 = vcvt.f32.s32 %v113
    %v115 = vcvt.f32.s32 %v109
    %v116 = vshll.u32 %v115, 16
    %v117 = vadd.s32 %v116, %v114
    %vm118 = vcmp.eq.s32.totalorder %v100, %v117
    %v119 = vsel %vm118, 1, 0
    %v120 = vcvt.s32.f32 %v119
    %vm121 = vcmask 130048
    %v123 = vsel %vm121, %v120, 0
    %125 = vmatprep.subr.mxu0 0.0
    %126 = vmatpush1.msra.mxu0 0.0
    %127 = vmatprep.subr.mxu0 0.0
    %128 = vmatpush1.msra.mxu0 0.0
    %129 = vmatprep.subr.mxu0 0.0
    %130 = vmatpush1.msra.mxu0 0.0
    %131 = vmatprep.subr.mxu0 0.0
    %132 = vmatpush1.msra.mxu0 0.0
    %133 = vmatprep.subr.mxu0 0.0
    %134 = vmatpush1.msra.mxu0 0.0
    %135 = vmatprep.subr.mxu0 0.0
    %136 = vmatpush1.msra.mxu0 0.0
    %137 = vmatprep.subr.mxu0 0.0
    %138 = vmatpush1.msra.mxu0 0.0
    %139 = vmatprep.subr.mxu0 0.0
    %140 = vmatpush1.msra.mxu0 0.0
    %141 = vmatprep.subr.mxu0 0.0
    %142 = vmatpush1.msra.mxu0 0.0
    %143 = vmatprep.subr.mxu0 0.0
    %144 = vmatpush1.msra.mxu0 0.0
    %145 = vmatprep.subr.mxu0 0.0
    %146 = vmatpush1.msra.mxu0 0.0
    %147 = vmatprep.subr.mxu0 0.0
    %148 = vmatpush1.msra.mxu0 0.0
    %149 = vmatprep.subr.mxu0 0.0
    %150 = vmatpush1.msra.mxu0 0.0
    %151 = vmatprep.subr.mxu0 0.0
    %152 = vmatpush1.msra.mxu0 0.0
    %153 = vmatprep.subr.mxu0 0.0
    %154 = vmatpush1.msra.mxu0 %v14
    %155 = vmatprep.subr.mxu0 0.0
    %156 = vmatpush1.msra.mxu0 %v13
    %157 = vmatprep.subr.mxu0 0.0
    %158 = vmatpush2.msra.mxu0 0.0
    %159 = vmatprep.subr.mxu0 0.0
    %160 = vmatpush2.msra.mxu0 0.0
    %161 = vmatprep.subr.mxu0 0.0
    %162 = vmatpush2.msra.mxu0 0.0
    %163 = vmatprep.subr.mxu0 0.0
    %164 = vmatpush2.msra.mxu0 0.0
    %165 = vmatprep.subr.mxu0 0.0
    %166 = vmatpush2.msra.mxu0 0.0
    %167 = vmatprep.subr.mxu0 0.0
    %168 = vmatpush2.msra.mxu0 0.0
    %169 = vmatprep.subr.mxu0 0.0
    %170 = vmatpush2.msra.mxu0 0.0
    %171 = vmatprep.subr.mxu0 0.0
    %172 = vmatpush2.msra.mxu0 0.0
    %173 = vmatprep.subr.mxu0 0.0
    %174 = vmatpush2.msra.mxu0 0.0
    %175 = vmatprep.subr.mxu0 0.0
    %176 = vmatpush2.msra.mxu0 0.0
    %177 = vmatprep.subr.mxu0 0.0
    %178 = vmatpush2.msra.mxu0 0.0
    %179 = vmatprep.subr.mxu0 0.0
    %180 = vmatpush2.msra.mxu0 0.0
    %181 = vmatprep.subr.mxu0 0.0
    %182 = vmatpush2.msra.mxu0 0.0
    %183 = vmatprep.subr.mxu0 0.0
    %184 = vmatpush2.msra.mxu0 0.0
    %185 = vmatprep.subr.mxu0 0.0
    %186 = vmatpush2.msra.mxu0 0.0
    %187 = vmatprep.subr.mxu0 0.0
    %188 = vmatpush2.msra.mxu0 0.0
    %189 = vmatprep.mubr.f32.mxu0 0.0
    %190 = vmatmul.mubr.f32.gmra.mxu0 %v123
    %v191 = vpop.f32.mrf.mxu0
    %v192 = vadd.f32 0.0, %v191
    %v193 = vpop.f32.mrf.mxu0
    %194 = vdwg.mxu0
    %vm195 = vcmask 60416
    %196 = vst.msk [vmem:[#allocation2] sm:$0xf] %vm195, %v192
    %v197 = vld [vmem:[%s0] sm:$0xf]
    %s198 = scalar_lea.vmem %s1, 16
    %v199 = vld [vmem:[%s198] sm:$0xff]
    %v200 = vld [vmem:[%s198 + $0x8] sm:$0xff]
    %202 = vrot.lane.b32.xlu0 %v197, 120
    %v203 = vpop.permute.xlu0 %202
    %v204 = vsel %vm15, %v203, 0
    %v207 = vsel %vm15, %v199, 0
    %v210 = vsel %vm15, %v200, 0
    %212 = vmatprep.subr.mxu0 0.0
    %213 = vmatpush1.xpose.msra.mxu0 0.0
    %214 = vmatprep.subr.mxu0 0.0
    %215 = vmatpush1.xpose.msra.mxu0 0.0
    %216 = vmatprep.subr.mxu0 0.0
    %217 = vmatpush1.xpose.msra.mxu0 0.0
    %218 = vmatprep.subr.mxu0 0.0
    %219 = vmatpush1.xpose.msra.mxu0 0.0
    %220 = vmatprep.subr.mxu0 0.0
    %221 = vmatpush1.xpose.msra.mxu0 0.0
    %222 = vmatprep.subr.mxu0 0.0
    %223 = vmatpush1.xpose.msra.mxu0 0.0
    %224 = vmatprep.subr.mxu0 0.0
    %225 = vmatpush1.xpose.msra.mxu0 0.0
    %226 = vmatprep.subr.mxu0 0.0
    %227 = vmatpush1.xpose.msra.mxu0 0.0
    %228 = vmatprep.subr.mxu0 0.0
    %229 = vmatpush1.xpose.msra.mxu0 0.0
    %230 = vmatprep.subr.mxu0 0.0
    %231 = vmatpush1.xpose.msra.mxu0 0.0
    %232 = vmatprep.subr.mxu0 0.0
    %233 = vmatpush1.xpose.msra.mxu0 0.0
    %234 = vmatprep.subr.mxu0 0.0
    %235 = vmatpush1.xpose.msra.mxu0 0.0
    %236 = vmatprep.subr.mxu0 0.0
    %237 = vmatpush1.xpose.msra.mxu0 0.0
    %238 = vmatprep.subr.mxu0 0.0
    %239 = vmatpush1.xpose.msra.mxu0 0.0
    %240 = vmatprep.subr.mxu0 0.0
    %241 = vmatpush1.xpose.msra.mxu0 %v210
    %242 = vmatprep.subr.mxu0 0.0
    %243 = vmatpush1.xpose.msra.mxu0 %v207
    %244 = vmatprep.subr.mxu0 0.0
    %245 = vmatpush2.xpose.msra.mxu0 0.0
    %246 = vmatprep.subr.mxu0 0.0
    %247 = vmatpush2.xpose.msra.mxu0 0.0
    %248 = vmatprep.subr.mxu0 0.0
    %249 = vmatpush2.xpose.msra.mxu0 0.0
    %250 = vmatprep.subr.mxu0 0.0
    %251 = vmatpush2.xpose.msra.mxu0 0.0
    %252 = vmatprep.subr.mxu0 0.0
    %253 = vmatpush2.xpose.msra.mxu0 0.0
    %254 = vmatprep.subr.mxu0 0.0
    %255 = vmatpush2.xpose.msra.mxu0 0.0
    %256 = vmatprep.subr.mxu0 0.0
    %257 = vmatpush2.xpose.msra.mxu0 0.0
    %258 = vmatprep.subr.mxu0 0.0
    %259 = vmatpush2.xpose.msra.mxu0 0.0
    %260 = vmatprep.subr.mxu0 0.0
    %261 = vmatpush2.xpose.msra.mxu0 0.0
    %262 = vmatprep.subr.mxu0 0.0
    %263 = vmatpush2.xpose.msra.mxu0 0.0
    %264 = vmatprep.subr.mxu0 0.0
    %265 = vmatpush2.xpose.msra.mxu0 0.0
    %266 = vmatprep.subr.mxu0 0.0
    %267 = vmatpush2.xpose.msra.mxu0 0.0
    %268 = vmatprep.subr.mxu0 0.0
    %269 = vmatpush2.xpose.msra.mxu0 0.0
    %270 = vmatprep.subr.mxu0 0.0
    %271 = vmatpush2.xpose.msra.mxu0 0.0
    %272 = vmatprep.subr.mxu0 0.0
    %273 = vmatpush2.xpose.msra.mxu0 0.0
    %274 = vmatprep.subr.mxu0 0.0
    %275 = vmatpush2.xpose.msra.mxu0 0.0
    %276 = vmatprep.mubr.f32.mxu0 0.0
    %277 = vmatmul.mubr.f32.gmra.mxu0 %v204
    %v278 = vpop.f32.mrf.mxu0
    %v279 = vadd.f32 0.0, %v278
    %v280 = vpop.f32.mrf.mxu0
    %281 = vdwg.mxu0
    %v282 = vsel %vm95, %v279, -inf
    %283 = vmax.xlane.f32.xlu0 %v282
    %v284 = vpop.xlane.xlu0 %283
    %vm285 = vcmp.eq.f32.partialorder %v279, %v284
    %v286 = vsel %vm285, %v100, 16
    %v287 = vsel %vm95, %v286, 2147483647
    %v288 = vand.u32 %v287, 65535
    %v289 = vshra.s32 %v287, 16
    %v290 = vcvt.s32.f32 %v288
    %v291 = vcvt.s32.f32 %v289
    %292 = vmin.xlane.f32.xlu0 %v291
    %v293 = vpop.xlane.xlu0 %292
    %vm294 = vcmp.eq.f32.partialorder %v291, %v293
    %v295 = vsel %vm294, %v290, inf
    %296 = vmin.xlane.f32.xlu0 %v295
    %v297 = vpop.xlane.xlu0 %296
    %v298 = vcvt.f32.s32 %v297
    %v299 = vcvt.f32.s32 %v293
    %v300 = vshll.u32 %v299, 16
    %v301 = vadd.s32 %v300, %v298
    %vm302 = vcmp.eq.s32.totalorder %v100, %v301
    %v303 = vsel %vm302, 1, 0
    %v304 = vcvt.s32.f32 %v303
    %v306 = vsel %vm121, %v304, 0
    %308 = vmatprep.subr.mxu0 0.0
    %309 = vmatpush1.msra.mxu0 0.0
    %310 = vmatprep.subr.mxu0 0.0
    %311 = vmatpush1.msra.mxu0 0.0
    %312 = vmatprep.subr.mxu0 0.0
    %313 = vmatpush1.msra.mxu0 0.0
    %314 = vmatprep.subr.mxu0 0.0
    %315 = vmatpush1.msra.mxu0 0.0
    %316 = vmatprep.subr.mxu0 0.0
    %317 = vmatpush1.msra.mxu0 0.0
    %318 = vmatprep.subr.mxu0 0.0
    %319 = vmatpush1.msra.mxu0 0.0
    %320 = vmatprep.subr.mxu0 0.0
    %321 = vmatpush1.msra.mxu0 0.0
    %322 = vmatprep.subr.mxu0 0.0
    %323 = vmatpush1.msra.mxu0 0.0
    %324 = vmatprep.subr.mxu0 0.0
    %325 = vmatpush1.msra.mxu0 0.0
    %326 = vmatprep.subr.mxu0 0.0
    %327 = vmatpush1.msra.mxu0 0.0
    %328 = vmatprep.subr.mxu0 0.0
    %329 = vmatpush1.msra.mxu0 0.0
    %330 = vmatprep.subr.mxu0 0.0
    %331 = vmatpush1.msra.mxu0 0.0
    %332 = vmatprep.subr.mxu0 0.0
    %333 = vmatpush1.msra.mxu0 0.0
    %334 = vmatprep.subr.mxu0 0.0
    %335 = vmatpush1.msra.mxu0 0.0
    %336 = vmatprep.subr.mxu0 0.0
    %337 = vmatpush1.msra.mxu0 %v200
    %338 = vmatprep.subr.mxu0 0.0
    %339 = vmatpush1.msra.mxu0 %v199
    %340 = vmatprep.subr.mxu0 0.0
    %341 = vmatpush2.msra.mxu0 0.0
    %342 = vmatprep.subr.mxu0 0.0
    %343 = vmatpush2.msra.mxu0 0.0
    %344 = vmatprep.subr.mxu0 0.0
    %345 = vmatpush2.msra.mxu0 0.0
    %346 = vmatprep.subr.mxu0 0.0
    %347 = vmatpush2.msra.mxu0 0.0
    %348 = vmatprep.subr.mxu0 0.0
    %349 = vmatpush2.msra.mxu0 0.0
    %350 = vmatprep.subr.mxu0 0.0
    %351 = vmatpush2.msra.mxu0 0.0
    %352 = vmatprep.subr.mxu0 0.0
    %353 = vmatpush2.msra.mxu0 0.0
    %354 = vmatprep.subr.mxu0 0.0
    %355 = vmatpush2.msra.mxu0 0.0
    %356 = vmatprep.subr.mxu0 0.0
    %357 = vmatpush2.msra.mxu0 0.0
    %358 = vmatprep.subr.mxu0 0.0
    %359 = vmatpush2.msra.mxu0 0.0
    %360 = vmatprep.subr.mxu0 0.0
    %361 = vmatpush2.msra.mxu0 0.0
    %362 = vmatprep.subr.mxu0 0.0
    %363 = vmatpush2.msra.mxu0 0.0
    %364 = vmatprep.subr.mxu0 0.0
    %365 = vmatpush2.msra.mxu0 0.0
    %366 = vmatprep.subr.mxu0 0.0
    %367 = vmatpush2.msra.mxu0 0.0
    %368 = vmatprep.subr.mxu0 0.0
    %369 = vmatpush2.msra.mxu0 0.0
    %370 = vmatprep.subr.mxu0 0.0
    %371 = vmatpush2.msra.mxu0 0.0
    %372 = vmatprep.mubr.f32.mxu0 0.0
    %373 = vmatmul.mubr.f32.gmra.mxu0 %v306
    %v374 = vpop.f32.mrf.mxu0
    %v375 = vadd.f32 0.0, %v374
    %v376 = vpop.f32.mrf.mxu0
    %377 = vdwg.mxu0
    %379 = vrot.lane.b32.xlu0 %v375, 8
    %v380 = vpop.permute.xlu0 %379
    %vm382 = vcmask 126016
    %383 = vst.msk [vmem:[#allocation2] sm:$0xf] %vm382, %v380
    %v384 = vld [vmem:[%s0] sm:$0xf]
    %s385 = scalar_lea.vmem %s1, 32
    %v386 = vld [vmem:[%s385] sm:$0xff]
    %v387 = vld [vmem:[%s385 + $0x8] sm:$0xff]
    %389 = vrot.lane.b32.xlu0 %v384, 112
    %v390 = vpop.permute.xlu0 %389
    %v391 = vsel %vm15, %v390, 0
    %v394 = vsel %vm15, %v386, 0
    %v397 = vsel %vm15, %v387, 0
    %399 = vmatprep.subr.mxu0 0.0
    %400 = vmatpush1.xpose.msra.mxu0 0.0
    %401 = vmatprep.subr.mxu0 0.0
    %402 = vmatpush1.xpose.msra.mxu0 0.0
    %403 = vmatprep.subr.mxu0 0.0
    %404 = vmatpush1.xpose.msra.mxu0 0.0
    %405 = vmatprep.subr.mxu0 0.0
    %406 = vmatpush1.xpose.msra.mxu0 0.0
    %407 = vmatprep.subr.mxu0 0.0
    %408 = vmatpush1.xpose.msra.mxu0 0.0
    %409 = vmatprep.subr.mxu0 0.0
    %410 = vmatpush1.xpose.msra.mxu0 0.0
    %411 = vmatprep.subr.mxu0 0.0
    %412 = vmatpush1.xpose.msra.mxu0 0.0
    %413 = vmatprep.subr.mxu0 0.0
    %414 = vmatpush1.xpose.msra.mxu0 0.0
    %415 = vmatprep.subr.mxu0 0.0
    %416 = vmatpush1.xpose.msra.mxu0 0.0
    %417 = vmatprep.subr.mxu0 0.0
    %418 = vmatpush1.xpose.msra.mxu0 0.0
    %419 = vmatprep.subr.mxu0 0.0
    %420 = vmatpush1.xpose.msra.mxu0 0.0
    %421 = vmatprep.subr.mxu0 0.0
    %422 = vmatpush1.xpose.msra.mxu0 0.0
    %423 = vmatprep.subr.mxu0 0.0
    %424 = vmatpush1.xpose.msra.mxu0 0.0
    %425 = vmatprep.subr.mxu0 0.0
    %426 = vmatpush1.xpose.msra.mxu0 0.0
    %427 = vmatprep.subr.mxu0 0.0
    %428 = vmatpush1.xpose.msra.mxu0 %v397
    %429 = vmatprep.subr.mxu0 0.0
    %430 = vmatpush1.xpose.msra.mxu0 %v394
    %431 = vmatprep.subr.mxu0 0.0
    %432 = vmatpush2.xpose.msra.mxu0 0.0
    %433 = vmatprep.subr.mxu0 0.0
    %434 = vmatpush2.xpose.msra.mxu0 0.0
    %435 = vmatprep.subr.mxu0 0.0
    %436 = vmatpush2.xpose.msra.mxu0 0.0
    %437 = vmatprep.subr.mxu0 0.0
    %438 = vmatpush2.xpose.msra.mxu0 0.0
    %439 = vmatprep.subr.mxu0 0.0
    %440 = vmatpush2.xpose.msra.mxu0 0.0
    %441 = vmatprep.subr.mxu0 0.0
    %442 = vmatpush2.xpose.msra.mxu0 0.0
    %443 = vmatprep.subr.mxu0 0.0
    %444 = vmatpush2.xpose.msra.mxu0 0.0
    %445 = vmatprep.subr.mxu0 0.0
    %446 = vmatpush2.xpose.msra.mxu0 0.0
    %447 = vmatprep.subr.mxu0 0.0
    %448 = vmatpush2.xpose.msra.mxu0 0.0
    %449 = vmatprep.subr.mxu0 0.0
    %450 = vmatpush2.xpose.msra.mxu0 0.0
    %451 = vmatprep.subr.mxu0 0.0
    %452 = vmatpush2.xpose.msra.mxu0 0.0
    %453 = vmatprep.subr.mxu0 0.0
    %454 = vmatpush2.xpose.msra.mxu0 0.0
    %455 = vmatprep.subr.mxu0 0.0
    %456 = vmatpush2.xpose.msra.mxu0 0.0
    %457 = vmatprep.subr.mxu0 0.0
    %458 = vmatpush2.xpose.msra.mxu0 0.0
    %459 = vmatprep.subr.mxu0 0.0
    %460 = vmatpush2.xpose.msra.mxu0 0.0
    %461 = vmatprep.subr.mxu0 0.0
    %462 = vmatpush2.xpose.msra.mxu0 0.0
    %463 = vmatprep.mubr.f32.mxu0 0.0
    %464 = vmatmul.mubr.f32.gmra.mxu0 %v391
    %v465 = vpop.f32.mrf.mxu0
    %v466 = vadd.f32 0.0, %v465
    %v467 = vpop.f32.mrf.mxu0
    %468 = vdwg.mxu0
    %v469 = vsel %vm95, %v466, -inf
    %470 = vmax.xlane.f32.xlu0 %v469
    %v471 = vpop.xlane.xlu0 %470
    %vm472 = vcmp.eq.f32.partialorder %v466, %v471
    %v473 = vsel %vm472, %v100, 16
    %v474 = vsel %vm95, %v473, 2147483647
    %v475 = vand.u32 %v474, 65535
    %v476 = vshra.s32 %v474, 16
    %v477 = vcvt.s32.f32 %v475
    %v478 = vcvt.s32.f32 %v476
    %479 = vmin.xlane.f32.xlu0 %v478
    %v480 = vpop.xlane.xlu0 %479
    %vm481 = vcmp.eq.f32.partialorder %v478, %v480
    %v482 = vsel %vm481, %v477, inf
    %483 = vmin.xlane.f32.xlu0 %v482
    %v484 = vpop.xlane.xlu0 %483
    %v485 = vcvt.f32.s32 %v484
    %v486 = vcvt.f32.s32 %v480
    %v487 = vshll.u32 %v486, 16
    %v488 = vadd.s32 %v487, %v485
    %vm489 = vcmp.eq.s32.totalorder %v100, %v488
    %v490 = vsel %vm489, 1, 0
    %v491 = vcvt.s32.f32 %v490
    %v493 = vsel %vm121, %v491, 0
    %495 = vmatprep.subr.mxu0 0.0
    %496 = vmatpush1.msra.mxu0 0.0
    %497 = vmatprep.subr.mxu0 0.0
    %498 = vmatpush1.msra.mxu0 0.0
    %499 = vmatprep.subr.mxu0 0.0
    %500 = vmatpush1.msra.mxu0 0.0
    %501 = vmatprep.subr.mxu0 0.0
    %502 = vmatpush1.msra.mxu0 0.0
    %503 = vmatprep.subr.mxu0 0.0
    %504 = vmatpush1.msra.mxu0 0.0
    %505 = vmatprep.subr.mxu0 0.0
    %506 = vmatpush1.msra.mxu0 0.0
    %507 = vmatprep.subr.mxu0 0.0
    %508 = vmatpush1.msra.mxu0 0.0
    %509 = vmatprep.subr.mxu0 0.0
    %510 = vmatpush1.msra.mxu0 0.0
    %511 = vmatprep.subr.mxu0 0.0
    %512 = vmatpush1.msra.mxu0 0.0
    %513 = vmatprep.subr.mxu0 0.0
    %514 = vmatpush1.msra.mxu0 0.0
    %515 = vmatprep.subr.mxu0 0.0
    %516 = vmatpush1.msra.mxu0 0.0
    %517 = vmatprep.subr.mxu0 0.0
    %518 = vmatpush1.msra.mxu0 0.0
    %519 = vmatprep.subr.mxu0 0.0
    %520 = vmatpush1.msra.mxu0 0.0
    %521 = vmatprep.subr.mxu0 0.0
    %522 = vmatpush1.msra.mxu0 0.0
    %523 = vmatprep.subr.mxu0 0.0
    %524 = vmatpush1.msra.mxu0 %v387
    %525 = vmatprep.subr.mxu0 0.0
    %526 = vmatpush1.msra.mxu0 %v386
    %527 = vmatprep.subr.mxu0 0.0
    %528 = vmatpush2.msra.mxu0 0.0
    %529 = vmatprep.subr.mxu0 0.0
    %530 = vmatpush2.msra.mxu0 0.0
    %531 = vmatprep.subr.mxu0 0.0
    %532 = vmatpush2.msra.mxu0 0.0
    %533 = vmatprep.subr.mxu0 0.0
    %534 = vmatpush2.msra.mxu0 0.0
    %535 = vmatprep.subr.mxu0 0.0
    %536 = vmatpush2.msra.mxu0 0.0
    %537 = vmatprep.subr.mxu0 0.0
    %538 = vmatpush2.msra.mxu0 0.0
    %539 = vmatprep.subr.mxu0 0.0
    %540 = vmatpush2.msra.mxu0 0.0
    %541 = vmatprep.subr.mxu0 0.0
    %542 = vmatpush2.msra.mxu0 0.0
    %543 = vmatprep.subr.mxu0 0.0
    %544 = vmatpush2.msra.mxu0 0.0
    %545 = vmatprep.subr.mxu0 0.0
    %546 = vmatpush2.msra.mxu0 0.0
    %547 = vmatprep.subr.mxu0 0.0
    %548 = vmatpush2.msra.mxu0 0.0
    %549 = vmatprep.subr.mxu0 0.0
    %550 = vmatpush2.msra.mxu0 0.0
    %551 = vmatprep.subr.mxu0 0.0
    %552 = vmatpush2.msra.mxu0 0.0
    %553 = vmatprep.subr.mxu0 0.0
    %554 = vmatpush2.msra.mxu0 0.0
    %555 = vmatprep.subr.mxu0 0.0
    %556 = vmatpush2.msra.mxu0 0.0
    %557 = vmatprep.subr.mxu0 0.0
    %558 = vmatpush2.msra.mxu0 0.0
    %559 = vmatprep.mubr.f32.mxu0 0.0
    %560 = vmatmul.mubr.f32.gmra.mxu0 %v493
    %v561 = vpop.f32.mrf.mxu0
    %v562 = vadd.f32 0.0, %v561
    %v563 = vpop.f32.mrf.mxu0
    %564 = vdwg.mxu0
    %566 = vrot.lane.b32.xlu0 %v562, 16
    %v567 = vpop.permute.xlu0 %566
    %vm569 = vcmask 191616
    %570 = vst.msk [vmem:[#allocation2] sm:$0xf] %vm569, %v567
    %v571 = vld [vmem:[%s0] sm:$0xf]
    %s572 = scalar_lea.vmem %s1, 48
    %v573 = vld [vmem:[%s572] sm:$0xff]
    %v574 = vld [vmem:[%s572 + $0x8] sm:$0xff]
    %576 = vrot.lane.b32.xlu0 %v571, 104
    %v577 = vpop.permute.xlu0 %576
    %v578 = vsel %vm15, %v577, 0
    %v581 = vsel %vm15, %v573, 0
    %v584 = vsel %vm15, %v574, 0
    %586 = vmatprep.subr.mxu0 0.0
    %587 = vmatpush1.xpose.msra.mxu0 0.0
    %588 = vmatprep.subr.mxu0 0.0
    %589 = vmatpush1.xpose.msra.mxu0 0.0
    %590 = vmatprep.subr.mxu0 0.0
    %591 = vmatpush1.xpose.msra.mxu0 0.0
    %592 = vmatprep.subr.mxu0 0.0
    %593 = vmatpush1.xpose.msra.mxu0 0.0
    %594 = vmatprep.subr.mxu0 0.0
    %595 = vmatpush1.xpose.msra.mxu0 0.0
    %596 = vmatprep.subr.mxu0 0.0
    %597 = vmatpush1.xpose.msra.mxu0 0.0
    %598 = vmatprep.subr.mxu0 0.0
    %599 = vmatpush1.xpose.msra.mxu0 0.0
    %600 = vmatprep.subr.mxu0 0.0
    %601 = vmatpush1.xpose.msra.mxu0 0.0
    %602 = vmatprep.subr.mxu0 0.0
    %603 = vmatpush1.xpose.msra.mxu0 0.0
    %604 = vmatprep.subr.mxu0 0.0
    %605 = vmatpush1.xpose.msra.mxu0 0.0
    %606 = vmatprep.subr.mxu0 0.0
    %607 = vmatpush1.xpose.msra.mxu0 0.0
    %608 = vmatprep.subr.mxu0 0.0
    %609 = vmatpush1.xpose.msra.mxu0 0.0
    %610 = vmatprep.subr.mxu0 0.0
    %611 = vmatpush1.xpose.msra.mxu0 0.0
    %612 = vmatprep.subr.mxu0 0.0
    %613 = vmatpush1.xpose.msra.mxu0 0.0
    %614 = vmatprep.subr.mxu0 0.0
    %615 = vmatpush1.xpose.msra.mxu0 %v584
    %616 = vmatprep.subr.mxu0 0.0
    %617 = vmatpush1.xpose.msra.mxu0 %v581
    %618 = vmatprep.subr.mxu0 0.0
    %619 = vmatpush2.xpose.msra.mxu0 0.0
    %620 = vmatprep.subr.mxu0 0.0
    %621 = vmatpush2.xpose.msra.mxu0 0.0
    %622 = vmatprep.subr.mxu0 0.0
    %623 = vmatpush2.xpose.msra.mxu0 0.0
    %624 = vmatprep.subr.mxu0 0.0
    %625 = vmatpush2.xpose.msra.mxu0 0.0
    %626 = vmatprep.subr.mxu0 0.0
    %627 = vmatpush2.xpose.msra.mxu0 0.0
    %628 = vmatprep.subr.mxu0 0.0
    %629 = vmatpush2.xpose.msra.mxu0 0.0
    %630 = vmatprep.subr.mxu0 0.0
    %631 = vmatpush2.xpose.msra.mxu0 0.0
    %632 = vmatprep.subr.mxu0 0.0
    %633 = vmatpush2.xpose.msra.mxu0 0.0
    %634 = vmatprep.subr.mxu0 0.0
    %635 = vmatpush2.xpose.msra.mxu0 0.0
    %636 = vmatprep.subr.mxu0 0.0
    %637 = vmatpush2.xpose.msra.mxu0 0.0
    %638 = vmatprep.subr.mxu0 0.0
    %639 = vmatpush2.xpose.msra.mxu0 0.0
    %640 = vmatprep.subr.mxu0 0.0
    %641 = vmatpush2.xpose.msra.mxu0 0.0
    %642 = vmatprep.subr.mxu0 0.0
    %643 = vmatpush2.xpose.msra.mxu0 0.0
    %644 = vmatprep.subr.mxu0 0.0
    %645 = vmatpush2.xpose.msra.mxu0 0.0
    %646 = vmatprep.subr.mxu0 0.0
    %647 = vmatpush2.xpose.msra.mxu0 0.0
    %648 = vmatprep.subr.mxu0 0.0
    %649 = vmatpush2.xpose.msra.mxu0 0.0
    %650 = vmatprep.mubr.f32.mxu0 0.0
    %651 = vmatmul.mubr.f32.gmra.mxu0 %v578
    %v652 = vpop.f32.mrf.mxu0
    %v653 = vadd.f32 0.0, %v652
    %v654 = vpop.f32.mrf.mxu0
    %655 = vdwg.mxu0
    %v656 = vsel %vm95, %v653, -inf
    %657 = vmax.xlane.f32.xlu0 %v656
    %v658 = vpop.xlane.xlu0 %657
    %vm659 = vcmp.eq.f32.partialorder %v653, %v658
    %v660 = vsel %vm659, %v100, 16
    %v661 = vsel %vm95, %v660, 2147483647
    %v662 = vand.u32 %v661, 65535
    %v663 = vshra.s32 %v661, 16
    %v664 = vcvt.s32.f32 %v662
    %v665 = vcvt.s32.f32 %v663
    %666 = vmin.xlane.f32.xlu0 %v665
    %v667 = vpop.xlane.xlu0 %666
    %vm668 = vcmp.eq.f32.partialorder %v665, %v667
    %v669 = vsel %vm668, %v664, inf
    %670 = vmin.xlane.f32.xlu0 %v669
    %v671 = vpop.xlane.xlu0 %670
    %v672 = vcvt.f32.s32 %v671
    %v673 = vcvt.f32.s32 %v667
    %v674 = vshll.u32 %v673, 16
    %v675 = vadd.s32 %v674, %v672
    %vm676 = vcmp.eq.s32.totalorder %v100, %v675
    %v677 = vsel %vm676, 1, 0
    %v678 = vcvt.s32.f32 %v677
    %v680 = vsel %vm121, %v678, 0
    %682 = vmatprep.subr.mxu0 0.0
    %683 = vmatpush1.msra.mxu0 0.0
    %684 = vmatprep.subr.mxu0 0.0
    %685 = vmatpush1.msra.mxu0 0.0
    %686 = vmatprep.subr.mxu0 0.0
    %687 = vmatpush1.msra.mxu0 0.0
    %688 = vmatprep.subr.mxu0 0.0
    %689 = vmatpush1.msra.mxu0 0.0
    %690 = vmatprep.subr.mxu0 0.0
    %691 = vmatpush1.msra.mxu0 0.0
    %692 = vmatprep.subr.mxu0 0.0
    %693 = vmatpush1.msra.mxu0 0.0
    %694 = vmatprep.subr.mxu0 0.0
    %695 = vmatpush1.msra.mxu0 0.0
    %696 = vmatprep.subr.mxu0 0.0
    %697 = vmatpush1.msra.mxu0 0.0
    %698 = vmatprep.subr.mxu0 0.0
    %699 = vmatpush1.msra.mxu0 0.0
    %700 = vmatprep.subr.mxu0 0.0
    %701 = vmatpush1.msra.mxu0 0.0
    %702 = vmatprep.subr.mxu0 0.0
    %703 = vmatpush1.msra.mxu0 0.0
    %704 = vmatprep.subr.mxu0 0.0
    %705 = vmatpush1.msra.mxu0 0.0
    %706 = vmatprep.subr.mxu0 0.0
    %707 = vmatpush1.msra.mxu0 0.0
    %708 = vmatprep.subr.mxu0 0.0
    %709 = vmatpush1.msra.mxu0 0.0
    %710 = vmatprep.subr.mxu0 0.0
    %711 = vmatpush1.msra.mxu0 %v574
    %712 = vmatprep.subr.mxu0 0.0
    %713 = vmatpush1.msra.mxu0 %v573
    %714 = vmatprep.subr.mxu0 0.0
    %715 = vmatpush2.msra.mxu0 0.0
    %716 = vmatprep.subr.mxu0 0.0
    %717 = vmatpush2.msra.mxu0 0.0
    %718 = vmatprep.subr.mxu0 0.0
    %719 = vmatpush2.msra.mxu0 0.0
    %720 = vmatprep.subr.mxu0 0.0
    %721 = vmatpush2.msra.mxu0 0.0
    %722 = vmatprep.subr.mxu0 0.0
    %723 = vmatpush2.msra.mxu0 0.0
    %724 = vmatprep.subr.mxu0 0.0
    %725 = vmatpush2.msra.mxu0 0.0
    %726 = vmatprep.subr.mxu0 0.0
    %727 = vmatpush2.msra.mxu0 0.0
    %728 = vmatprep.subr.mxu0 0.0
    %729 = vmatpush2.msra.mxu0 0.0
    %730 = vmatprep.subr.mxu0 0.0
    %731 = vmatpush2.msra.mxu0 0.0
    %732 = vmatprep.subr.mxu0 0.0
    %733 = vmatpush2.msra.mxu0 0.0
    %734 = vmatprep.subr.mxu0 0.0
    %735 = vmatpush2.msra.mxu0 0.0
    %736 = vmatprep.subr.mxu0 0.0
    %737 = vmatpush2.msra.mxu0 0.0
    %738 = vmatprep.subr.mxu0 0.0
    %739 = vmatpush2.msra.mxu0 0.0
    %740 = vmatprep.subr.mxu0 0.0
    %741 = vmatpush2.msra.mxu0 0.0
    %742 = vmatprep.subr.mxu0 0.0
    %743 = vmatpush2.msra.mxu0 0.0
    %744 = vmatprep.subr.mxu0 0.0
    %745 = vmatpush2.msra.mxu0 0.0
    %746 = vmatprep.mubr.f32.mxu0 0.0
    %747 = vmatmul.mubr.f32.gmra.mxu0 %v680
    %v748 = vpop.f32.mrf.mxu0
    %v749 = vadd.f32 0.0, %v748
    %v750 = vpop.f32.mrf.mxu0
    %751 = vdwg.mxu0
    %753 = vrot.lane.b32.xlu0 %v749, 24
    %v754 = vpop.permute.xlu0 %753
    %vm756 = vcmask 257216
    %757 = vst.msk [vmem:[#allocation2] sm:$0xf] %vm756, %v754
    %v758 = vld [vmem:[%s0] sm:$0xf]
    %s759 = scalar_lea.vmem %s1, 64
    %v760 = vld [vmem:[%s759] sm:$0xff]
    %v761 = vld [vmem:[%s759 + $0x8] sm:$0xff]
    %763 = vrot.lane.b32.xlu0 %v758, 96
    %v764 = vpop.permute.xlu0 %763
    %v765 = vsel %vm15, %v764, 0
    %v768 = vsel %vm15, %v760, 0
    %v771 = vsel %vm15, %v761, 0
    %773 = vmatprep.subr.mxu0 0.0
    %774 = vmatpush1.xpose.msra.mxu0 0.0
    %775 = vmatprep.subr.mxu0 0.0
    %776 = vmatpush1.xpose.msra.mxu0 0.0
    %777 = vmatprep.subr.mxu0 0.0
    %778 = vmatpush1.xpose.msra.mxu0 0.0
    %779 = vmatprep.subr.mxu0 0.0
    %780 = vmatpush1.xpose.msra.mxu0 0.0
    %781 = vmatprep.subr.mxu0 0.0
    %782 = vmatpush1.xpose.msra.mxu0 0.0
    %783 = vmatprep.subr.mxu0 0.0
    %784 = vmatpush1.xpose.msra.mxu0 0.0
    %785 = vmatprep.subr.mxu0 0.0
    %786 = vmatpush1.xpose.msra.mxu0 0.0
    %787 = vmatprep.subr.mxu0 0.0
    %788 = vmatpush1.xpose.msra.mxu0 0.0
    %789 = vmatprep.subr.mxu0 0.0
    %790 = vmatpush1.xpose.msra.mxu0 0.0
    %791 = vmatprep.subr.mxu0 0.0
    %792 = vmatpush1.xpose.msra.mxu0 0.0
    %793 = vmatprep.subr.mxu0 0.0
    %794 = vmatpush1.xpose.msra.mxu0 0.0
    %795 = vmatprep.subr.mxu0 0.0
    %796 = vmatpush1.xpose.msra.mxu0 0.0
    %797 = vmatprep.subr.mxu0 0.0
    %798 = vmatpush1.xpose.msra.mxu0 0.0
    %799 = vmatprep.subr.mxu0 0.0
    %800 = vmatpush1.xpose.msra.mxu0 0.0
    %801 = vmatprep.subr.mxu0 0.0
    %802 = vmatpush1.xpose.msra.mxu0 %v771
    %803 = vmatprep.subr.mxu0 0.0
    %804 = vmatpush1.xpose.msra.mxu0 %v768
    %805 = vmatprep.subr.mxu0 0.0
    %806 = vmatpush2.xpose.msra.mxu0 0.0
    %807 = vmatprep.subr.mxu0 0.0
    %808 = vmatpush2.xpose.msra.mxu0 0.0
    %809 = vmatprep.subr.mxu0 0.0
    %810 = vmatpush2.xpose.msra.mxu0 0.0
    %811 = vmatprep.subr.mxu0 0.0
    %812 = vmatpush2.xpose.msra.mxu0 0.0
    %813 = vmatprep.subr.mxu0 0.0
    %814 = vmatpush2.xpose.msra.mxu0 0.0
    %815 = vmatprep.subr.mxu0 0.0
    %816 = vmatpush2.xpose.msra.mxu0 0.0
    %817 = vmatprep.subr.mxu0 0.0
    %818 = vmatpush2.xpose.msra.mxu0 0.0
    %819 = vmatprep.subr.mxu0 0.0
    %820 = vmatpush2.xpose.msra.mxu0 0.0
    %821 = vmatprep.subr.mxu0 0.0
    %822 = vmatpush2.xpose.msra.mxu0 0.0
    %823 = vmatprep.subr.mxu0 0.0
    %824 = vmatpush2.xpose.msra.mxu0 0.0
    %825 = vmatprep.subr.mxu0 0.0
    %826 = vmatpush2.xpose.msra.mxu0 0.0
    %827 = vmatprep.subr.mxu0 0.0
    %828 = vmatpush2.xpose.msra.mxu0 0.0
    %829 = vmatprep.subr.mxu0 0.0
    %830 = vmatpush2.xpose.msra.mxu0 0.0
    %831 = vmatprep.subr.mxu0 0.0
    %832 = vmatpush2.xpose.msra.mxu0 0.0
    %833 = vmatprep.subr.mxu0 0.0
    %834 = vmatpush2.xpose.msra.mxu0 0.0
    %835 = vmatprep.subr.mxu0 0.0
    %836 = vmatpush2.xpose.msra.mxu0 0.0
    %837 = vmatprep.mubr.f32.mxu0 0.0
    %838 = vmatmul.mubr.f32.gmra.mxu0 %v765
    %v839 = vpop.f32.mrf.mxu0
    %v840 = vadd.f32 0.0, %v839
    %v841 = vpop.f32.mrf.mxu0
    %842 = vdwg.mxu0
    %v843 = vsel %vm95, %v840, -inf
    %844 = vmax.xlane.f32.xlu0 %v843
    %v845 = vpop.xlane.xlu0 %844
    %vm846 = vcmp.eq.f32.partialorder %v840, %v845
    %v847 = vsel %vm846, %v100, 16
    %v848 = vsel %vm95, %v847, 2147483647
    %v849 = vand.u32 %v848, 65535
    %v850 = vshra.s32 %v848, 16
    %v851 = vcvt.s32.f32 %v849
    %v852 = vcvt.s32.f32 %v850
    %853 = vmin.xlane.f32.xlu0 %v852
    %v854 = vpop.xlane.xlu0 %853
    %vm855 = vcmp.eq.f32.partialorder %v852, %v854
    %v856 = vsel %vm855, %v851, inf
    %857 = vmin.xlane.f32.xlu0 %v856
    %v858 = vpop.xlane.xlu0 %857
    %v859 = vcvt.f32.s32 %v858
    %v860 = vcvt.f32.s32 %v854
    %v861 = vshll.u32 %v860, 16
    %v862 = vadd.s32 %v861, %v859
    %vm863 = vcmp.eq.s32.totalorder %v100, %v862
    %v864 = vsel %vm863, 1, 0
    %v865 = vcvt.s32.f32 %v864
    %v867 = vsel %vm121, %v865, 0
    %869 = vmatprep.subr.mxu0 0.0
    %870 = vmatpush1.msra.mxu0 0.0
    %871 = vmatprep.subr.mxu0 0.0
    %872 = vmatpush1.msra.mxu0 0.0
    %873 = vmatprep.subr.mxu0 0.0
    %874 = vmatpush1.msra.mxu0 0.0
    %875 = vmatprep.subr.mxu0 0.0
    %876 = vmatpush1.msra.mxu0 0.0
    %877 = vmatprep.subr.mxu0 0.0
    %878 = vmatpush1.msra.mxu0 0.0
    %879 = vmatprep.subr.mxu0 0.0
    %880 = vmatpush1.msra.mxu0 0.0
    %881 = vmatprep.subr.mxu0 0.0
    %882 = vmatpush1.msra.mxu0 0.0
    %883 = vmatprep.subr.mxu0 0.0
    %884 = vmatpush1.msra.mxu0 0.0
    %885 = vmatprep.subr.mxu0 0.0
    %886 = vmatpush1.msra.mxu0 0.0
    %887 = vmatprep.subr.mxu0 0.0
    %888 = vmatpush1.msra.mxu0 0.0
    %889 = vmatprep.subr.mxu0 0.0
    %890 = vmatpush1.msra.mxu0 0.0
    %891 = vmatprep.subr.mxu0 0.0
    %892 = vmatpush1.msra.mxu0 0.0
    %893 = vmatprep.subr.mxu0 0.0
    %894 = vmatpush1.msra.mxu0 0.0
    %895 = vmatprep.subr.mxu0 0.0
    %896 = vmatpush1.msra.mxu0 0.0
    %897 = vmatprep.subr.mxu0 0.0
    %898 = vmatpush1.msra.mxu0 %v761
    %899 = vmatprep.subr.mxu0 0.0
    %900 = vmatpush1.msra.mxu0 %v760
    %901 = vmatprep.subr.mxu0 0.0
    %902 = vmatpush2.msra.mxu0 0.0
    %903 = vmatprep.subr.mxu0 0.0
    %904 = vmatpush2.msra.mxu0 0.0
    %905 = vmatprep.subr.mxu0 0.0
    %906 = vmatpush2.msra.mxu0 0.0
    %907 = vmatprep.subr.mxu0 0.0
    %908 = vmatpush2.msra.mxu0 0.0
    %909 = vmatprep.subr.mxu0 0.0
    %910 = vmatpush2.msra.mxu0 0.0
    %911 = vmatprep.subr.mxu0 0.0
    %912 = vmatpush2.msra.mxu0 0.0
    %913 = vmatprep.subr.mxu0 0.0
    %914 = vmatpush2.msra.mxu0 0.0
    %915 = vmatprep.subr.mxu0 0.0
    %916 = vmatpush2.msra.mxu0 0.0
    %917 = vmatprep.subr.mxu0 0.0
    %918 = vmatpush2.msra.mxu0 0.0
    %919 = vmatprep.subr.mxu0 0.0
    %920 = vmatpush2.msra.mxu0 0.0
    %921 = vmatprep.subr.mxu0 0.0
    %922 = vmatpush2.msra.mxu0 0.0
    %923 = vmatprep.subr.mxu0 0.0
    %924 = vmatpush2.msra.mxu0 0.0
    %925 = vmatprep.subr.mxu0 0.0
    %926 = vmatpush2.msra.mxu0 0.0
    %927 = vmatprep.subr.mxu0 0.0
    %928 = vmatpush2.msra.mxu0 0.0
    %929 = vmatprep.subr.mxu0 0.0
    %930 = vmatpush2.msra.mxu0 0.0
    %931 = vmatprep.subr.mxu0 0.0
    %932 = vmatpush2.msra.mxu0 0.0
    %933 = vmatprep.mubr.f32.mxu0 0.0
    %934 = vmatmul.mubr.f32.gmra.mxu0 %v867
    %v935 = vpop.f32.mrf.mxu0
    %v936 = vadd.f32 0.0, %v935
    %v937 = vpop.f32.mrf.mxu0
    %938 = vdwg.mxu0
    %940 = vrot.lane.b32.xlu0 %v936, 32
    %v941 = vpop.permute.xlu0 %940
    %vm943 = vcmask 322816
    %944 = vst.msk [vmem:[#allocation2] sm:$0xf] %vm943, %v941
    %v945 = vld [vmem:[%s0] sm:$0xf]
    %s946 = scalar_lea.vmem %s1, 80
    %v947 = vld [vmem:[%s946] sm:$0xff]
    %v948 = vld [vmem:[%s946 + $0x8] sm:$0xff]
    %950 = vrot.lane.b32.xlu0 %v945, 88
    %v951 = vpop.permute.xlu0 %950
    %v952 = vsel %vm15, %v951, 0
    %v955 = vsel %vm15, %v947, 0
    %v958 = vsel %vm15, %v948, 0
    %960 = vmatprep.subr.mxu0 0.0
    %961 = vmatpush1.xpose.msra.mxu0 0.0
    %962 = vmatprep.subr.mxu0 0.0
    %963 = vmatpush1.xpose.msra.mxu0 0.0
    %964 = vmatprep.subr.mxu0 0.0
    %965 = vmatpush1.xpose.msra.mxu0 0.0
    %966 = vmatprep.subr.mxu0 0.0
    %967 = vmatpush1.xpose.msra.mxu0 0.0
    %968 = vmatprep.subr.mxu0 0.0
    %969 = vmatpush1.xpose.msra.mxu0 0.0
    %970 = vmatprep.subr.mxu0 0.0
    %971 = vmatpush1.xpose.msra.mxu0 0.0
    %972 = vmatprep.subr.mxu0 0.0
    %973 = vmatpush1.xpose.msra.mxu0 0.0
    %974 = vmatprep.subr.mxu0 0.0
    %975 = vmatpush1.xpose.msra.mxu0 0.0
    %976 = vmatprep.subr.mxu0 0.0
    %977 = vmatpush1.xpose.msra.mxu0 0.0
    %978 = vmatprep.subr.mxu0 0.0
    %979 = vmatpush1.xpose.msra.mxu0 0.0
    %980 = vmatprep.subr.mxu0 0.0
    %981 = vmatpush1.xpose.msra.mxu0 0.0
    %982 = vmatprep.subr.mxu0 0.0
    %983 = vmatpush1.xpose.msra.mxu0 0.0
    %984 = vmatprep.subr.mxu0 0.0
    %985 = vmatpush1.xpose.msra.mxu0 0.0
    %986 = vmatprep.subr.mxu0 0.0
    %987 = vmatpush1.xpose.msra.mxu0 0.0
    %988 = vmatprep.subr.mxu0 0.0
    %989 = vmatpush1.xpose.msra.mxu0 %v958
    %990 = vmatprep.subr.mxu0 0.0
    %991 = vmatpush1.xpose.msra.mxu0 %v955
    %992 = vmatprep.subr.mxu0 0.0
    %993 = vmatpush2.xpose.msra.mxu0 0.0
    %994 = vmatprep.subr.mxu0 0.0
    %995 = vmatpush2.xpose.msra.mxu0 0.0
    %996 = vmatprep.subr.mxu0 0.0
    %997 = vmatpush2.xpose.msra.mxu0 0.0
    %998 = vmatprep.subr.mxu0 0.0
    %999 = vmatpush2.xpose.msra.mxu0 0.0
    %1000 = vmatprep.subr.mxu0 0.0
    %1001 = vmatpush2.xpose.msra.mxu0 0.0
    %1002 = vmatprep.subr.mxu0 0.0
    %1003 = vmatpush2.xpose.msra.mxu0 0.0
    %1004 = vmatprep.subr.mxu0 0.0
    %1005 = vmatpush2.xpose.msra.mxu0 0.0
    %1006 = vmatprep.subr.mxu0 0.0
    %1007 = vmatpush2.xpose.msra.mxu0 0.0
    %1008 = vmatprep.subr.mxu0 0.0
    %1009 = vmatpush2.xpose.msra.mxu0 0.0
    %1010 = vmatprep.subr.mxu0 0.0
    %1011 = vmatpush2.xpose.msra.mxu0 0.0
    %1012 = vmatprep.subr.mxu0 0.0
    %1013 = vmatpush2.xpose.msra.mxu0 0.0
    %1014 = vmatprep.subr.mxu0 0.0
    %1015 = vmatpush2.xpose.msra.mxu0 0.0
    %1016 = vmatprep.subr.mxu0 0.0
    %1017 = vmatpush2.xpose.msra.mxu0 0.0
    %1018 = vmatprep.subr.mxu0 0.0
    %1019 = vmatpush2.xpose.msra.mxu0 0.0
    %1020 = vmatprep.subr.mxu0 0.0
    %1021 = vmatpush2.xpose.msra.mxu0 0.0
    %1022 = vmatprep.subr.mxu0 0.0
    %1023 = vmatpush2.xpose.msra.mxu0 0.0
    %1024 = vmatprep.mubr.f32.mxu0 0.0
    %1025 = vmatmul.mubr.f32.gmra.mxu0 %v952
    %v1026 = vpop.f32.mrf.mxu0
    %v1027 = vadd.f32 0.0, %v1026
    %v1028 = vpop.f32.mrf.mxu0
    %1029 = vdwg.mxu0
    %v1030 = vsel %vm95, %v1027, -inf
    %1031 = vmax.xlane.f32.xlu0 %v1030
    %v1032 = vpop.xlane.xlu0 %1031
    %vm1033 = vcmp.eq.f32.partialorder %v1027, %v1032
    %v1034 = vsel %vm1033, %v100, 16
    %v1035 = vsel %vm95, %v1034, 2147483647
    %v1036 = vand.u32 %v1035, 65535
    %v1037 = vshra.s32 %v1035, 16
    %v1038 = vcvt.s32.f32 %v1036
    %v1039 = vcvt.s32.f32 %v1037
    %1040 = vmin.xlane.f32.xlu0 %v1039
    %v1041 = vpop.xlane.xlu0 %1040
    %vm1042 = vcmp.eq.f32.partialorder %v1039, %v1041
    %v1043 = vsel %vm1042, %v1038, inf
    %1044 = vmin.xlane.f32.xlu0 %v1043
    %v1045 = vpop.xlane.xlu0 %1044
    %v1046 = vcvt.f32.s32 %v1045
    %v1047 = vcvt.f32.s32 %v1041
    %v1048 = vshll.u32 %v1047, 16
    %v1049 = vadd.s32 %v1048, %v1046
    %vm1050 = vcmp.eq.s32.totalorder %v100, %v1049
    %v1051 = vsel %vm1050, 1, 0
    %v1052 = vcvt.s32.f32 %v1051
    %v1054 = vsel %vm121, %v1052, 0
    %1056 = vmatprep.subr.mxu0 0.0
    %1057 = vmatpush1.msra.mxu0 0.0
    %1058 = vmatprep.subr.mxu0 0.0
    %1059 = vmatpush1.msra.mxu0 0.0
    %1060 = vmatprep.subr.mxu0 0.0
    %1061 = vmatpush1.msra.mxu0 0.0
    %1062 = vmatprep.subr.mxu0 0.0
    %1063 = vmatpush1.msra.mxu0 0.0
    %1064 = vmatprep.subr.mxu0 0.0
    %1065 = vmatpush1.msra.mxu0 0.0
    %1066 = vmatprep.subr.mxu0 0.0
    %1067 = vmatpush1.msra.mxu0 0.0
    %1068 = vmatprep.subr.mxu0 0.0
    %1069 = vmatpush1.msra.mxu0 0.0
    %1070 = vmatprep.subr.mxu0 0.0
    %1071 = vmatpush1.msra.mxu0 0.0
    %1072 = vmatprep.subr.mxu0 0.0
    %1073 = vmatpush1.msra.mxu0 0.0
    %1074 = vmatprep.subr.mxu0 0.0
    %1075 = vmatpush1.msra.mxu0 0.0
    %1076 = vmatprep.subr.mxu0 0.0
    %1077 = vmatpush1.msra.mxu0 0.0
    %1078 = vmatprep.subr.mxu0 0.0
    %1079 = vmatpush1.msra.mxu0 0.0
    %1080 = vmatprep.subr.mxu0 0.0
    %1081 = vmatpush1.msra.mxu0 0.0
    %1082 = vmatprep.subr.mxu0 0.0
    %1083 = vmatpush1.msra.mxu0 0.0
    %1084 = vmatprep.subr.mxu0 0.0
    %1085 = vmatpush1.msra.mxu0 %v948
    %1086 = vmatprep.subr.mxu0 0.0
    %1087 = vmatpush1.msra.mxu0 %v947
    %1088 = vmatprep.subr.mxu0 0.0
    %1089 = vmatpush2.msra.mxu0 0.0
    %1090 = vmatprep.subr.mxu0 0.0
    %1091 = vmatpush2.msra.mxu0 0.0
    %1092 = vmatprep.subr.mxu0 0.0
    %1093 = vmatpush2.msra.mxu0 0.0
    %1094 = vmatprep.subr.mxu0 0.0
    %1095 = vmatpush2.msra.mxu0 0.0
    %1096 = vmatprep.subr.mxu0 0.0
    %1097 = vmatpush2.msra.mxu0 0.0
    %1098 = vmatprep.subr.mxu0 0.0
    %1099 = vmatpush2.msra.mxu0 0.0
    %1100 = vmatprep.subr.mxu0 0.0
    %1101 = vmatpush2.msra.mxu0 0.0
    %1102 = vmatprep.subr.mxu0 0.0
    %1103 = vmatpush2.msra.mxu0 0.0
    %1104 = vmatprep.subr.mxu0 0.0
    %1105 = vmatpush2.msra.mxu0 0.0
    %1106 = vmatprep.subr.mxu0 0.0
    %1107 = vmatpush2.msra.mxu0 0.0
    %1108 = vmatprep.subr.mxu0 0.0
    %1109 = vmatpush2.msra.mxu0 0.0
    %1110 = vmatprep.subr.mxu0 0.0
    %1111 = vmatpush2.msra.mxu0 0.0
    %1112 = vmatprep.subr.mxu0 0.0
    %1113 = vmatpush2.msra.mxu0 0.0
    %1114 = vmatprep.subr.mxu0 0.0
    %1115 = vmatpush2.msra.mxu0 0.0
    %1116 = vmatprep.subr.mxu0 0.0
    %1117 = vmatpush2.msra.mxu0 0.0
    %1118 = vmatprep.subr.mxu0 0.0
    %1119 = vmatpush2.msra.mxu0 0.0
    %1120 = vmatprep.mubr.f32.mxu0 0.0
    %1121 = vmatmul.mubr.f32.gmra.mxu0 %v1054
    %v1122 = vpop.f32.mrf.mxu0
    %v1123 = vadd.f32 0.0, %v1122
    %v1124 = vpop.f32.mrf.mxu0
    %1125 = vdwg.mxu0
    %1127 = vrot.lane.b32.xlu0 %v1123, 40
    %v1128 = vpop.permute.xlu0 %1127
    %vm1130 = vcmask 388416
    %1131 = vst.msk [vmem:[#allocation2] sm:$0xf] %vm1130, %v1128
    %v1132 = vld [vmem:[%s0] sm:$0xf]
    %s1133 = scalar_lea.vmem %s1, 96
    %v1134 = vld [vmem:[%s1133] sm:$0xff]
    %v1135 = vld [vmem:[%s1133 + $0x8] sm:$0xff]
    %1137 = vrot.lane.b32.xlu0 %v1132, 80
    %v1138 = vpop.permute.xlu0 %1137
    %v1139 = vsel %vm15, %v1138, 0
    %v1142 = vsel %vm15, %v1134, 0
    %v1145 = vsel %vm15, %v1135, 0
    %1147 = vmatprep.subr.mxu0 0.0
    %1148 = vmatpush1.xpose.msra.mxu0 0.0
    %1149 = vmatprep.subr.mxu0 0.0
    %1150 = vmatpush1.xpose.msra.mxu0 0.0
    %1151 = vmatprep.subr.mxu0 0.0
    %1152 = vmatpush1.xpose.msra.mxu0 0.0
    %1153 = vmatprep.subr.mxu0 0.0
    %1154 = vmatpush1.xpose.msra.mxu0 0.0
    %1155 = vmatprep.subr.mxu0 0.0
    %1156 = vmatpush1.xpose.msra.mxu0 0.0
    %1157 = vmatprep.subr.mxu0 0.0
    %1158 = vmatpush1.xpose.msra.mxu0 0.0
    %1159 = vmatprep.subr.mxu0 0.0
    %1160 = vmatpush1.xpose.msra.mxu0 0.0
    %1161 = vmatprep.subr.mxu0 0.0
    %1162 = vmatpush1.xpose.msra.mxu0 0.0
    %1163 = vmatprep.subr.mxu0 0.0
    %1164 = vmatpush1.xpose.msra.mxu0 0.0
    %1165 = vmatprep.subr.mxu0 0.0
    %1166 = vmatpush1.xpose.msra.mxu0 0.0
    %1167 = vmatprep.subr.mxu0 0.0
    %1168 = vmatpush1.xpose.msra.mxu0 0.0
    %1169 = vmatprep.subr.mxu0 0.0
    %1170 = vmatpush1.xpose.msra.mxu0 0.0
    %1171 = vmatprep.subr.mxu0 0.0
    %1172 = vmatpush1.xpose.msra.mxu0 0.0
    %1173 = vmatprep.subr.mxu0 0.0
    %1174 = vmatpush1.xpose.msra.mxu0 0.0
    %1175 = vmatprep.subr.mxu0 0.0
    %1176 = vmatpush1.xpose.msra.mxu0 %v1145
    %1177 = vmatprep.subr.mxu0 0.0
    %1178 = vmatpush1.xpose.msra.mxu0 %v1142
    %1179 = vmatprep.subr.mxu0 0.0
    %1180 = vmatpush2.xpose.msra.mxu0 0.0
    %1181 = vmatprep.subr.mxu0 0.0
    %1182 = vmatpush2.xpose.msra.mxu0 0.0
    %1183 = vmatprep.subr.mxu0 0.0
    %1184 = vmatpush2.xpose.msra.mxu0 0.0
    %1185 = vmatprep.subr.mxu0 0.0
    %1186 = vmatpush2.xpose.msra.mxu0 0.0
    %1187 = vmatprep.subr.mxu0 0.0
    %1188 = vmatpush2.xpose.msra.mxu0 0.0
    %1189 = vmatprep.subr.mxu0 0.0
    %1190 = vmatpush2.xpose.msra.mxu0 0.0
    %1191 = vmatprep.subr.mxu0 0.0
    %1192 = vmatpush2.xpose.msra.mxu0 0.0
    %1193 = vmatprep.subr.mxu0 0.0
    %1194 = vmatpush2.xpose.msra.mxu0 0.0
    %1195 = vmatprep.subr.mxu0 0.0
    %1196 = vmatpush2.xpose.msra.mxu0 0.0
    %1197 = vmatprep.subr.mxu0 0.0
    %1198 = vmatpush2.xpose.msra.mxu0 0.0
    %1199 = vmatprep.subr.mxu0 0.0
    %1200 = vmatpush2.xpose.msra.mxu0 0.0
    %1201 = vmatprep.subr.mxu0 0.0
    %1202 = vmatpush2.xpose.msra.mxu0 0.0
    %1203 = vmatprep.subr.mxu0 0.0
    %1204 = vmatpush2.xpose.msra.mxu0 0.0
    %1205 = vmatprep.subr.mxu0 0.0
    %1206 = vmatpush2.xpose.msra.mxu0 0.0
    %1207 = vmatprep.subr.mxu0 0.0
    %1208 = vmatpush2.xpose.msra.mxu0 0.0
    %1209 = vmatprep.subr.mxu0 0.0
    %1210 = vmatpush2.xpose.msra.mxu0 0.0
    %1211 = vmatprep.mubr.f32.mxu0 0.0
    %1212 = vmatmul.mubr.f32.gmra.mxu0 %v1139
    %v1213 = vpop.f32.mrf.mxu0
    %v1214 = vadd.f32 0.0, %v1213
    %v1215 = vpop.f32.mrf.mxu0
    %1216 = vdwg.mxu0
    %v1217 = vsel %vm95, %v1214, -inf
    %1218 = vmax.xlane.f32.xlu0 %v1217
    %v1219 = vpop.xlane.xlu0 %1218
    %vm1220 = vcmp.eq.f32.partialorder %v1214, %v1219
    %v1221 = vsel %vm1220, %v100, 16
    %v1222 = vsel %vm95, %v1221, 2147483647
    %v1223 = vand.u32 %v1222, 65535
    %v1224 = vshra.s32 %v1222, 16
    %v1225 = vcvt.s32.f32 %v1223
    %v1226 = vcvt.s32.f32 %v1224
    %1227 = vmin.xlane.f32.xlu0 %v1226
    %v1228 = vpop.xlane.xlu0 %1227
    %vm1229 = vcmp.eq.f32.partialorder %v1226, %v1228
    %v1230 = vsel %vm1229, %v1225, inf
    %1231 = vmin.xlane.f32.xlu0 %v1230
    %v1232 = vpop.xlane.xlu0 %1231
    %v1233 = vcvt.f32.s32 %v1232
    %v1234 = vcvt.f32.s32 %v1228
    %v1235 = vshll.u32 %v1234, 16
    %v1236 = vadd.s32 %v1235, %v1233
    %vm1237 = vcmp.eq.s32.totalorder %v100, %v1236
    %v1238 = vsel %vm1237, 1, 0
    %v1239 = vcvt.s32.f32 %v1238
    %v1241 = vsel %vm121, %v1239, 0
    %1243 = vmatprep.subr.mxu0 0.0
    %1244 = vmatpush1.msra.mxu0 0.0
    %1245 = vmatprep.subr.mxu0 0.0
    %1246 = vmatpush1.msra.mxu0 0.0
    %1247 = vmatprep.subr.mxu0 0.0
    %1248 = vmatpush1.msra.mxu0 0.0
    %1249 = vmatprep.subr.mxu0 0.0
    %1250 = vmatpush1.msra.mxu0 0.0
    %1251 = vmatprep.subr.mxu0 0.0
    %1252 = vmatpush1.msra.mxu0 0.0
    %1253 = vmatprep.subr.mxu0 0.0
    %1254 = vmatpush1.msra.mxu0 0.0
    %1255 = vmatprep.subr.mxu0 0.0
    %1256 = vmatpush1.msra.mxu0 0.0
    %1257 = vmatprep.subr.mxu0 0.0
    %1258 = vmatpush1.msra.mxu0 0.0
    %1259 = vmatprep.subr.mxu0 0.0
    %1260 = vmatpush1.msra.mxu0 0.0
    %1261 = vmatprep.subr.mxu0 0.0
    %1262 = vmatpush1.msra.mxu0 0.0
    %1263 = vmatprep.subr.mxu0 0.0
    %1264 = vmatpush1.msra.mxu0 0.0
    %1265 = vmatprep.subr.mxu0 0.0
    %1266 = vmatpush1.msra.mxu0 0.0
    %1267 = vmatprep.subr.mxu0 0.0
    %1268 = vmatpush1.msra.mxu0 0.0
    %1269 = vmatprep.subr.mxu0 0.0
    %1270 = vmatpush1.msra.mxu0 0.0
    %1271 = vmatprep.subr.mxu0 0.0
    %1272 = vmatpush1.msra.mxu0 %v1135
    %1273 = vmatprep.subr.mxu0 0.0
    %1274 = vmatpush1.msra.mxu0 %v1134
    %1275 = vmatprep.subr.mxu0 0.0
    %1276 = vmatpush2.msra.mxu0 0.0
    %1277 = vmatprep.subr.mxu0 0.0
    %1278 = vmatpush2.msra.mxu0 0.0
    %1279 = vmatprep.subr.mxu0 0.0
    %1280 = vmatpush2.msra.mxu0 0.0
    %1281 = vmatprep.subr.mxu0 0.0
    %1282 = vmatpush2.msra.mxu0 0.0
    %1283 = vmatprep.subr.mxu0 0.0
    %1284 = vmatpush2.msra.mxu0 0.0
    %1285 = vmatprep.subr.mxu0 0.0
    %1286 = vmatpush2.msra.mxu0 0.0
    %1287 = vmatprep.subr.mxu0 0.0
    %1288 = vmatpush2.msra.mxu0 0.0
    %1289 = vmatprep.subr.mxu0 0.0
    %1290 = vmatpush2.msra.mxu0 0.0
    %1291 = vmatprep.subr.mxu0 0.0
    %1292 = vmatpush2.msra.mxu0 0.0
    %1293 = vmatprep.subr.mxu0 0.0
    %1294 = vmatpush2.msra.mxu0 0.0
    %1295 = vmatprep.subr.mxu0 0.0
    %1296 = vmatpush2.msra.mxu0 0.0
    %1297 = vmatprep.subr.mxu0 0.0
    %1298 = vmatpush2.msra.mxu0 0.0
    %1299 = vmatprep.subr.mxu0 0.0
    %1300 = vmatpush2.msra.mxu0 0.0
    %1301 = vmatprep.subr.mxu0 0.0
    %1302 = vmatpush2.msra.mxu0 0.0
    %1303 = vmatprep.subr.mxu0 0.0
    %1304 = vmatpush2.msra.mxu0 0.0
    %1305 = vmatprep.subr.mxu0 0.0
    %1306 = vmatpush2.msra.mxu0 0.0
    %1307 = vmatprep.mubr.f32.mxu0 0.0
    %1308 = vmatmul.mubr.f32.gmra.mxu0 %v1241
    %v1309 = vpop.f32.mrf.mxu0
    %v1310 = vadd.f32 0.0, %v1309
    %v1311 = vpop.f32.mrf.mxu0
    %1312 = vdwg.mxu0
    %1314 = vrot.lane.b32.xlu0 %v1310, 48
    %v1315 = vpop.permute.xlu0 %1314
    %vm1317 = vcmask 454016
    %1318 = vst.msk [vmem:[#allocation2] sm:$0xf] %vm1317, %v1315
    %v1319 = vld [vmem:[%s0] sm:$0xf]
    %s1320 = scalar_lea.vmem %s1, 112
    %v1321 = vld [vmem:[%s1320] sm:$0xff]
    %v1322 = vld [vmem:[%s1320 + $0x8] sm:$0xff]
    %1324 = vrot.lane.b32.xlu0 %v1319, 72
    %v1325 = vpop.permute.xlu0 %1324
    %v1326 = vsel %vm15, %v1325, 0
    %v1329 = vsel %vm15, %v1321, 0
    %v1332 = vsel %vm15, %v1322, 0
    %1334 = vmatprep.subr.mxu0 0.0
    %1335 = vmatpush1.xpose.msra.mxu0 0.0
    %1336 = vmatprep.subr.mxu0 0.0
    %1337 = vmatpush1.xpose.msra.mxu0 0.0
    %1338 = vmatprep.subr.mxu0 0.0
    %1339 = vmatpush1.xpose.msra.mxu0 0.0
    %1340 = vmatprep.subr.mxu0 0.0
    %1341 = vmatpush1.xpose.msra.mxu0 0.0
    %1342 = vmatprep.subr.mxu0 0.0
    %1343 = vmatpush1.xpose.msra.mxu0 0.0
    %1344 = vmatprep.subr.mxu0 0.0
    %1345 = vmatpush1.xpose.msra.mxu0 0.0
    %1346 = vmatprep.subr.mxu0 0.0
    %1347 = vmatpush1.xpose.msra.mxu0 0.0
    %1348 = vmatprep.subr.mxu0 0.0
    %1349 = vmatpush1.xpose.msra.mxu0 0.0
    %1350 = vmatprep.subr.mxu0 0.0
    %1351 = vmatpush1.xpose.msra.mxu0 0.0
    %1352 = vmatprep.subr.mxu0 0.0
    %1353 = vmatpush1.xpose.msra.mxu0 0.0
    %1354 = vmatprep.subr.mxu0 0.0
    %1355 = vmatpush1.xpose.msra.mxu0 0.0
    %1356 = vmatprep.subr.mxu0 0.0
    %1357 = vmatpush1.xpose.msra.mxu0 0.0
    %1358 = vmatprep.subr.mxu0 0.0
    %1359 = vmatpush1.xpose.msra.mxu0 0.0
    %1360 = vmatprep.subr.mxu0 0.0
    %1361 = vmatpush1.xpose.msra.mxu0 0.0
    %1362 = vmatprep.subr.mxu0 0.0
    %1363 = vmatpush1.xpose.msra.mxu0 %v1332
    %1364 = vmatprep.subr.mxu0 0.0
    %1365 = vmatpush1.xpose.msra.mxu0 %v1329
    %1366 = vmatprep.subr.mxu0 0.0
    %1367 = vmatpush2.xpose.msra.mxu0 0.0
    %1368 = vmatprep.subr.mxu0 0.0
    %1369 = vmatpush2.xpose.msra.mxu0 0.0
    %1370 = vmatprep.subr.mxu0 0.0
    %1371 = vmatpush2.xpose.msra.mxu0 0.0
    %1372 = vmatprep.subr.mxu0 0.0
    %1373 = vmatpush2.xpose.msra.mxu0 0.0
    %1374 = vmatprep.subr.mxu0 0.0
    %1375 = vmatpush2.xpose.msra.mxu0 0.0
    %1376 = vmatprep.subr.mxu0 0.0
    %1377 = vmatpush2.xpose.msra.mxu0 0.0
    %1378 = vmatprep.subr.mxu0 0.0
    %1379 = vmatpush2.xpose.msra.mxu0 0.0
    %1380 = vmatprep.subr.mxu0 0.0
    %1381 = vmatpush2.xpose.msra.mxu0 0.0
    %1382 = vmatprep.subr.mxu0 0.0
    %1383 = vmatpush2.xpose.msra.mxu0 0.0
    %1384 = vmatprep.subr.mxu0 0.0
    %1385 = vmatpush2.xpose.msra.mxu0 0.0
    %1386 = vmatprep.subr.mxu0 0.0
    %1387 = vmatpush2.xpose.msra.mxu0 0.0
    %1388 = vmatprep.subr.mxu0 0.0
    %1389 = vmatpush2.xpose.msra.mxu0 0.0
    %1390 = vmatprep.subr.mxu0 0.0
    %1391 = vmatpush2.xpose.msra.mxu0 0.0
    %1392 = vmatprep.subr.mxu0 0.0
    %1393 = vmatpush2.xpose.msra.mxu0 0.0
    %1394 = vmatprep.subr.mxu0 0.0
    %1395 = vmatpush2.xpose.msra.mxu0 0.0
    %1396 = vmatprep.subr.mxu0 0.0
    %1397 = vmatpush2.xpose.msra.mxu0 0.0
    %1398 = vmatprep.mubr.f32.mxu0 0.0
    %1399 = vmatmul.mubr.f32.gmra.mxu0 %v1326
    %v1400 = vpop.f32.mrf.mxu0
    %v1401 = vadd.f32 0.0, %v1400
    %v1402 = vpop.f32.mrf.mxu0
    %1403 = vdwg.mxu0
    %v1404 = vsel %vm95, %v1401, -inf
    %1405 = vmax.xlane.f32.xlu0 %v1404
    %v1406 = vpop.xlane.xlu0 %1405
    %vm1407 = vcmp.eq.f32.partialorder %v1401, %v1406
    %v1408 = vsel %vm1407, %v100, 16
    %v1409 = vsel %vm95, %v1408, 2147483647
    %v1410 = vand.u32 %v1409, 65535
    %v1411 = vshra.s32 %v1409, 16
    %v1412 = vcvt.s32.f32 %v1410
    %v1413 = vcvt.s32.f32 %v1411
    %1414 = vmin.xlane.f32.xlu0 %v1413
    %v1415 = vpop.xlane.xlu0 %1414
    %vm1416 = vcmp.eq.f32.partialorder %v1413, %v1415
    %v1417 = vsel %vm1416, %v1412, inf
    %1418 = vmin.xlane.f32.xlu0 %v1417
    %v1419 = vpop.xlane.xlu0 %1418
    %v1420 = vcvt.f32.s32 %v1419
    %v1421 = vcvt.f32.s32 %v1415
    %v1422 = vshll.u32 %v1421, 16
    %v1423 = vadd.s32 %v1422, %v1420
    %vm1424 = vcmp.eq.s32.totalorder %v100, %v1423
    %v1425 = vsel %vm1424, 1, 0
    %v1426 = vcvt.s32.f32 %v1425
    %v1428 = vsel %vm121, %v1426, 0
    %1430 = vmatprep.subr.mxu0 0.0
    %1431 = vmatpush1.msra.mxu0 0.0
    %1432 = vmatprep.subr.mxu0 0.0
    %1433 = vmatpush1.msra.mxu0 0.0
    %1434 = vmatprep.subr.mxu0 0.0
    %1435 = vmatpush1.msra.mxu0 0.0
    %1436 = vmatprep.subr.mxu0 0.0
    %1437 = vmatpush1.msra.mxu0 0.0
    %1438 = vmatprep.subr.mxu0 0.0
    %1439 = vmatpush1.msra.mxu0 0.0
    %1440 = vmatprep.subr.mxu0 0.0
    %1441 = vmatpush1.msra.mxu0 0.0
    %1442 = vmatprep.subr.mxu0 0.0
    %1443 = vmatpush1.msra.mxu0 0.0
    %1444 = vmatprep.subr.mxu0 0.0
    %1445 = vmatpush1.msra.mxu0 0.0
    %1446 = vmatprep.subr.mxu0 0.0
    %1447 = vmatpush1.msra.mxu0 0.0
    %1448 = vmatprep.subr.mxu0 0.0
    %1449 = vmatpush1.msra.mxu0 0.0
    %1450 = vmatprep.subr.mxu0 0.0
    %1451 = vmatpush1.msra.mxu0 0.0
    %1452 = vmatprep.subr.mxu0 0.0
    %1453 = vmatpush1.msra.mxu0 0.0
    %1454 = vmatprep.subr.mxu0 0.0
    %1455 = vmatpush1.msra.mxu0 0.0
    %1456 = vmatprep.subr.mxu0 0.0
    %1457 = vmatpush1.msra.mxu0 0.0
    %1458 = vmatprep.subr.mxu0 0.0
    %1459 = vmatpush1.msra.mxu0 %v1322
    %1460 = vmatprep.subr.mxu0 0.0
    %1461 = vmatpush1.msra.mxu0 %v1321
    %1462 = vmatprep.subr.mxu0 0.0
    %1463 = vmatpush2.msra.mxu0 0.0
    %1464 = vmatprep.subr.mxu0 0.0
    %1465 = vmatpush2.msra.mxu0 0.0
    %1466 = vmatprep.subr.mxu0 0.0
    %1467 = vmatpush2.msra.mxu0 0.0
    %1468 = vmatprep.subr.mxu0 0.0
    %1469 = vmatpush2.msra.mxu0 0.0
    %1470 = vmatprep.subr.mxu0 0.0
    %1471 = vmatpush2.msra.mxu0 0.0
    %1472 = vmatprep.subr.mxu0 0.0
    %1473 = vmatpush2.msra.mxu0 0.0
    %1474 = vmatprep.subr.mxu0 0.0
    %1475 = vmatpush2.msra.mxu0 0.0
    %1476 = vmatprep.subr.mxu0 0.0
    %1477 = vmatpush2.msra.mxu0 0.0
    %1478 = vmatprep.subr.mxu0 0.0
    %1479 = vmatpush2.msra.mxu0 0.0
    %1480 = vmatprep.subr.mxu0 0.0
    %1481 = vmatpush2.msra.mxu0 0.0
    %1482 = vmatprep.subr.mxu0 0.0
    %1483 = vmatpush2.msra.mxu0 0.0
    %1484 = vmatprep.subr.mxu0 0.0
    %1485 = vmatpush2.msra.mxu0 0.0
    %1486 = vmatprep.subr.mxu0 0.0
    %1487 = vmatpush2.msra.mxu0 0.0
    %1488 = vmatprep.subr.mxu0 0.0
    %1489 = vmatpush2.msra.mxu0 0.0
    %1490 = vmatprep.subr.mxu0 0.0
    %1491 = vmatpush2.msra.mxu0 0.0
    %1492 = vmatprep.subr.mxu0 0.0
    %1493 = vmatpush2.msra.mxu0 0.0
    %1494 = vmatprep.mubr.f32.mxu0 0.0
    %1495 = vmatmul.mubr.f32.gmra.mxu0 %v1428
    %v1496 = vpop.f32.mrf.mxu0
    %v1497 = vadd.f32 0.0, %v1496
    %v1498 = vpop.f32.mrf.mxu0
    %1499 = vdwg.mxu0
    %1501 = vrot.lane.b32.xlu0 %v1497, 56
    %v1502 = vpop.permute.xlu0 %1501
    %vm1504 = vcmask 519616
    %1505 = vst.msk [vmem:[#allocation2] sm:$0xf] %vm1504, %v1502
    // Predicated region
    $region10: #{tpu_custom_call.1} parent=1 // pred_check
      _
    $region11: #{tpu_custom_call.1} parent=1 // pred_check_branch
      %1507 = sbr.rel (0) target = $region13
    $region12: #{tpu_custom_call.1} parent=1 // pred_region
      %s1509 = ssub.s32 64, 64
      %1510 = vsyncadd [#allocation3], %s1509
      %s1512 = sshll.u32 [#allocation2], 4
      %s1513 = int_to_ptr.vmem [resolvable:$true] %s1512
      %1515 = dma.vmem_to_hbm [thread:$0]  %s1513, 64, %s2, [#allocation3]
    $region13: #{tpu_custom_call.1} parent=1 // pred_fallthru
      _
    // Predicated region
    $region14: #{tpu_custom_call.1} parent=1 // pred_check
      _
    $region15: #{tpu_custom_call.1} parent=1 // pred_check_branch
      %1517 = sbr.rel (0) target = $region17
    $region16: #{tpu_custom_call.1} parent=1 // pred_region
      %1518 = dma.done [#allocation3], 64
    $region17: #{tpu_custom_call.1} parent=1 // pred_fallthru
      _
    %1519 = vsyncpa [#allocation3], 1

</llo_original>
